<compile_context>
chip_gen: v7x
topology: tpu7x:2x2x1
jax: 0.10.0
libtpu: 0.0.40
codegen_flags: <defaults>
</compile_context>

<pallas_src>
import functools

import numpy as np
import jax
import jax.numpy as jnp
from jax import lax
from jax.experimental import pallas as pl
from jax.experimental.pallas import tpu as pltpu

_RNG = np.random.default_rng(0)  # deterministic synthetic parameters


def _round_up(x, m):
    return (x + m - 1) // m * m


def _pick_tile(size, candidates):
    for c in candidates:
        if c <= size and size % c == 0:
            return c
    return size


# ----------------------------------------------------------------------------
# Pallas kernel 1: fused matmul + scale/bias (+skip) (+ReLU)
#   accumulates directly into the resident output block across the K grid axis
# ----------------------------------------------------------------------------
@functools.lru_cache(maxsize=None)
def _make_matmul_kernel(relu, has_skip):
    def body(x_ref, w_ref, s_ref, b_ref, skip_ref, o_ref):
        k = pl.program_id(2)
        part = jnp.dot(x_ref[...], w_ref[...], preferred_element_type=jnp.float32)

        @pl.when(k == 0)
        def _():
            o_ref[...] = part

        @pl.when(k != 0)
        def _():
            o_ref[...] = o_ref[...] + part

        @pl.when(k == pl.num_programs(2) - 1)
        def _():
            y = o_ref[...] * s_ref[...] + b_ref[...]
            if has_skip:
                y = y + skip_ref[...]
            if relu:
                y = jnp.maximum(y, 0.0)
            o_ref[...] = y

    if has_skip:
        def kernel(x_ref, w_ref, s_ref, b_ref, skip_ref, o_ref):
            body(x_ref, w_ref, s_ref, b_ref, skip_ref, o_ref)
    else:
        def kernel(x_ref, w_ref, s_ref, b_ref, o_ref):
            body(x_ref, w_ref, s_ref, b_ref, None, o_ref)
    return kernel


def _fused_matmul(x, w, scale, bias, relu, skip=None):
    M, K = x.shape
    _, N = w.shape
    Mp = _round_up(M, 8)
    Kp = _round_up(K, 128)
    Np = _round_up(N, 128)
    tm = _pick_tile(Mp, (512, 256, 128))
    tk = _pick_tile(Kp, (512, 384, 256, 128))
    tn = _pick_tile(Np, (512, 384, 256, 128))
    xp = x if (Mp, Kp) == (M, K) else jnp.pad(x, ((0, Mp - M), (0, Kp - K)))
    wp = w if (Kp, Np) == (K, N) else jnp.pad(w, ((0, Kp - K), (0, Np - N)))
    sp = (scale if Np == N else jnp.pad(scale, (0, Np - N))).reshape(1, Np)
    bp = (bias if Np == N else jnp.pad(bias, (0, Np - N))).reshape(1, Np)
    in_specs = [
        pl.BlockSpec((tm, tk), lambda i, j, k: (i, k)),
        pl.BlockSpec((tk, tn), lambda i, j, k: (k, j)),
        pl.BlockSpec((1, tn), lambda i, j, k: (0, j)),
        pl.BlockSpec((1, tn), lambda i, j, k: (0, j)),
    ]
    args = [xp, wp, sp, bp]
    if skip is not None:
        skp = skip if (Mp, Np) == (M, N) else jnp.pad(
            skip, ((0, Mp - M), (0, Np - N)))
        in_specs.append(pl.BlockSpec((tm, tn), lambda i, j, k: (i, j)))
        args.append(skp)
    kernel = _make_matmul_kernel(relu, skip is not None)
    out = pl.pallas_call(
        kernel,
        out_shape=jax.ShapeDtypeStruct((Mp, Np), jnp.float32),
        grid_spec=pltpu.PrefetchScalarGridSpec(
            num_scalar_prefetch=0,
            grid=(Mp // tm, Np // tn, Kp // tk),
            in_specs=in_specs,
            out_specs=pl.BlockSpec((tm, tn), lambda i, j, k: (i, j)),
        ),
        compiler_params=pltpu.CompilerParams(
            dimension_semantics=("parallel", "parallel", "arbitrary"),
            vmem_limit_bytes=48 * 1024 * 1024),
    )(*args)
    if (Mp, Np) != (M, N):
        out = out[:M, :N]
    return out


# ----------------------------------------------------------------------------
# Pallas kernel 2: direct stride-1 conv (no HBM im2col) + fused epilogue
#   full padded activation block resident in VMEM; unrolled tap loop of
#   large MXU dots, each reading a shifted window of the block.
# ----------------------------------------------------------------------------
@functools.lru_cache(maxsize=None)
def _make_direct_conv_kernel(kh, kw, ho, wo, cin, relu, has_skip):
    taps = [(dy, dx) for dy in range(kh) for dx in range(kw)]

    def body(x_ref, w_ref, s_ref, b_ref, skip_ref, o_ref):
        acc = None
        for t, (dy, dx) in enumerate(taps):
            xs = x_ref[0, dy:dy + ho, dx:dx + wo, :]
            lhs = xs.reshape(ho * wo, cin)
            part = jnp.dot(lhs, w_ref[t * cin:(t + 1) * cin, :],
                           preferred_element_type=jnp.float32)
            acc = part if acc is None else acc + part
        y = acc * s_ref[...] + b_ref[...]
        if has_skip:
            y = y + skip_ref[...]
        if relu:
            y = jnp.maximum(y, 0.0)
        o_ref[...] = y.astype(o_ref.dtype)

    if has_skip:
        def kernel(x_ref, w_ref, s_ref, b_ref, skip_ref, o_ref):
            body(x_ref, w_ref, s_ref, b_ref, skip_ref, o_ref)
    else:
        def kernel(x_ref, w_ref, s_ref, b_ref, o_ref):
            body(x_ref, w_ref, s_ref, b_ref, None, o_ref)
    return kernel


def _direct_conv(x, w, scale, bias, skip2, relu):
    N, H, W, cin = x.shape
    kh, kw, _, cout = w.shape
    pad = (kh - 1) // 2
    Hp, Wp = H + 2 * pad, W + 2 * pad
    Mo = H * W
    xp = jnp.pad(x, ((0, 0), (pad, pad), (pad, pad), (0, 0))) if pad else x
    Np = _round_up(cout, 128)
    tn = _pick_tile(Np, (512, 384, 256, 128))
    wf = w.reshape(kh * kw * cin, cout)
    if Np != cout:
        wf = jnp.pad(wf, ((0, 0), (0, Np - cout)))
        scale = jnp.pad(scale, (0, Np - cout))
        bias = jnp.pad(bias, (0, Np - cout))
        if skip2 is not None:
            skip2 = jnp.pad(skip2, ((0, 0), (0, Np - cout)))
    s2 = scale.reshape(1, Np)
    b2 = bias.reshape(1, Np)
    in_specs = [
        pl.BlockSpec((1, Hp, Wp, cin), lambda n, j: (n, 0, 0, 0)),
        pl.BlockSpec((kh * kw * cin, tn), lambda n, j: (0, j)),
        pl.BlockSpec((1, tn), lambda n, j: (0, j)),
        pl.BlockSpec((1, tn), lambda n, j: (0, j)),
    ]
    args = [xp, wf, s2, b2]
    if skip2 is not None:
        in_specs.append(pl.BlockSpec((Mo, tn), lambda n, j: (n, j)))
        args.append(skip2)
    kernel = _make_direct_conv_kernel(kh, kw, H, W, cin, relu, skip2 is not None)
    out = pl.pallas_call(
        kernel,
        out_shape=jax.ShapeDtypeStruct((N * Mo, Np), jnp.float32),
        grid_spec=pltpu.PrefetchScalarGridSpec(
            num_scalar_prefetch=0,
            grid=(N, Np // tn),
            in_specs=in_specs,
            out_specs=pl.BlockSpec((Mo, tn), lambda n, j: (n, j)),
        ),
        compiler_params=pltpu.CompilerParams(
            dimension_semantics=("parallel", "parallel"),
            vmem_limit_bytes=48 * 1024 * 1024),
    )(*args)
    if Np != cout:
        out = out[:, :cout]
    return out.reshape(N, H, W, cout)


def _im2col(x, kh, kw, stride, pad):
    # Only used for strided convs and tiny spatial levels; hot stride-1 convs
    # use the direct Pallas conv kernel instead (no 9x HBM blowup).
    N, H, W, C = x.shape
    if pad:
        x = jnp.pad(x, ((0, 0), (pad, pad), (pad, pad), (0, 0)))
    Ho = (H + 2 * pad - kh) // stride + 1
    Wo = (W + 2 * pad - kw) // stride + 1
    cols = []
    for i in range(kh):
        for j in range(kw):
            cols.append(x[:, i:i + stride * (Ho - 1) + 1:stride,
                          j:j + stride * (Wo - 1) + 1:stride, :])
    cols = jnp.concatenate(cols, axis=-1)
    return cols.reshape(N * Ho * Wo, kh * kw * C), (N, Ho, Wo)


@functools.partial(jax.jit, static_argnames=("stride", "relu"))
def _conv2d_impl(x, w, scale, bias, skip, *, stride, relu):
    kh, kw, cin, cout = w.shape
    N, H, W, _ = x.shape
    pad = (kh - 1) // 2
    Ho = (H + 2 * pad - kh) // stride + 1
    Wo = (W + 2 * pad - kw) // stride + 1
    skip2 = None if skip is None else skip.reshape(N * Ho * Wo, cout)
    if kh == 1 and kw == 1 and stride == 1:
        y = _fused_matmul(x.reshape(N * H * W, cin), w.reshape(cin, cout),
                          scale, bias, relu, skip2)
        return y.reshape(N, Ho, Wo, cout)
    direct_ok = (stride == 1 and Wo % 8 == 0 and cin % 128 == 0
                 and (H + 2 * pad) * (W + 2 * pad) * cin * 4 <= 8 * 1024 * 1024)
    if direct_ok:
        return _direct_conv(x, w, scale, bias, skip2, relu)
    cols, _ = _im2col(x, kh, kw, stride, pad)
    y = _fused_matmul(cols, w.reshape(kh * kw * cin, cout),
                      scale, bias, relu, skip2)
    return y.reshape(N, Ho, Wo, cout)


def conv2d(x, w, scale, bias, stride, relu, skip=None):
    return _conv2d_impl(x, w, scale, bias, skip, stride=stride, relu=relu)


# ----------------------------------------------------------------------------
# Pallas kernel 3: tiled elementwise add (+ReLU) (used for hourglass merges)
# ----------------------------------------------------------------------------
@functools.lru_cache(maxsize=None)
def _make_add_kernel(relu):
    def kernel(a_ref, b_ref, o_ref):
        y = a_ref[...] + b_ref[...]
        if relu:
            y = jnp.maximum(y, 0.0)
        o_ref[...] = y
    return kernel


@functools.partial(jax.jit, static_argnames=("relu",))
def _add_act_impl(a, b, *, relu):
    shape = a.shape
    C = shape[-1]
    R = 1
    for d in shape[:-1]:
        R *= int(d)
    a2 = a.reshape(R, C)
    b2 = b.reshape(R, C)
    Rp = _round_up(R, 8)
    if Rp != R:
        a2 = jnp.pad(a2, ((0, Rp - R), (0, 0)))
        b2 = jnp.pad(b2, ((0, Rp - R), (0, 0)))
    tr = _pick_tile(Rp, (1024, 512, 256))
    kernel = _make_add_kernel(relu)
    out = pl.pallas_call(
        kernel,
        out_shape=jax.ShapeDtypeStruct((Rp, C), a.dtype),
        grid_spec=pltpu.PrefetchScalarGridSpec(
            num_scalar_prefetch=0,
            grid=(Rp // tr,),
            in_specs=[pl.BlockSpec((tr, C), lambda i: (i, 0)),
                      pl.BlockSpec((tr, C), lambda i: (i, 0))],
            out_specs=pl.BlockSpec((tr, C), lambda i: (i, 0)),
        ),
        compiler_params=pltpu.CompilerParams(
            dimension_semantics=("parallel",)),
    )(a2, b2)
    if Rp != R:
        out = out[:R]
    return out.reshape(shape)


def add_act(a, b, relu):
    return _add_act_impl(a, b, relu=relu)


# ----------------------------------------------------------------------------
# Pallas kernel 4: fused corner pooling merge
#   out = cummax_H(a, direction rev_h) + cummax_W(b, direction rev_w)
#   (no XLA transposes, both pools + add in one pass over VMEM blocks)
# ----------------------------------------------------------------------------
@functools.lru_cache(maxsize=None)
def _make_pool_merge_kernel(rev_h, rev_w, H, W, C):
    shifts = []
    s = 1
    while s < W:
        shifts.append(s)
        s *= 2

    def kernel(a_ref, b_ref, o_ref):
        # directional running max along H of `a`, written to the output
        order = range(H - 1, -1, -1) if rev_h else range(H)
        run = None
        for h in order:
            cur = a_ref[0, h, :, :]
            run = cur if run is None else jnp.maximum(run, cur)
            o_ref[0, h, :, :] = run
        # directional cumulative max along W of `b` (log-step scan), added in
        col = lax.broadcasted_iota(jnp.int32, (W, C), 0)
        steps = []
        for s in shifts:
            if rev_w:
                steps.append(((W - s) % W, col < (W - s)))
            else:
                steps.append((s, col >= s))
        for h in range(H):
            run_w = b_ref[0, h, :, :]
            for shift, mask in steps:
                rolled = pltpu.roll(run_w, shift, axis=0)
                run_w = jnp.where(mask, jnp.maximum(run_w, rolled), run_w)
            o_ref[0, h, :, :] = o_ref[0, h, :, :] + run_w

    return kernel


@functools.partial(jax.jit, static_argnames=("rev_h", "rev_w"))
def _pool_merge_impl(a, b, *, rev_h, rev_w):
    # TODO(synk): with batch=1 the grid has one step; tiling W/C would expose
    # pipelining and v7x 2-TC sharding, not needed at these sizes.
    N, H, W, C = a.shape
    kernel = _make_pool_merge_kernel(rev_h, rev_w, H, W, C)
    return pl.pallas_call(
        kernel,
        out_shape=jax.ShapeDtypeStruct(a.shape, a.dtype),
        grid_spec=pltpu.PrefetchScalarGridSpec(
            num_scalar_prefetch=0,
            grid=(N,),
            in_specs=[pl.BlockSpec((1, H, W, C), lambda n: (n, 0, 0, 0)),
                      pl.BlockSpec((1, H, W, C), lambda n: (n, 0, 0, 0))],
            out_specs=pl.BlockSpec((1, H, W, C), lambda n: (n, 0, 0, 0)),
        ),
        compiler_params=pltpu.CompilerParams(
            dimension_semantics=("parallel",)),
    )(a, b)


def upsample2x(x):  # nearest-neighbour x2 (glue)
    # TODO(synk): could be folded into the consuming add kernel.
    return jnp.repeat(jnp.repeat(x, 2, axis=1), 2, axis=2)


# ----------------------------------------------------------------------------
# Deterministic synthetic parameter construction (mirrors module __init__)
# ----------------------------------------------------------------------------
def _conv_w(kh, kw, cin, cout):
    std = 0.5 / np.sqrt(kh * kw * cin)
    return jnp.asarray(_RNG.normal(0.0, std, (kh, kw, cin, cout)).astype(np.float32))


def _bias_vec(c):
    return jnp.asarray(_RNG.normal(0.0, 0.05, (c,)).astype(np.float32))


def _bn(c):
    gamma = 1.0 + 0.1 * _RNG.normal(0.0, 1.0, (c,))
    beta = 0.1 * _RNG.normal(0.0, 1.0, (c,))
    mean = 0.1 * _RNG.normal(0.0, 1.0, (c,))
    var = 1.0 + 0.1 * _RNG.uniform(0.0, 1.0, (c,))
    scale = gamma / np.sqrt(var + 1e-5)
    bias = beta - mean * scale
    return (jnp.asarray(scale.astype(np.float32)),
            jnp.asarray(bias.astype(np.float32)))


def convolution_params(cin, cout, k, with_bn=True):
    p = {"w": _conv_w(k, k, cin, cout)}
    if with_bn:
        p["scale"], p["bias"] = _bn(cout)
    else:  # conv with bias, no BN
        p["scale"] = jnp.ones((cout,), jnp.float32)
        p["bias"] = _bias_vec(cout)
    return p


def convolution_fwd(p, x, stride=1):
    # conv -> (BN) -> ReLU
    return conv2d(x, p["w"], p["scale"], p["bias"], stride=stride, relu=True)


def convbn_params(cin, cout):  # Intermediate.__convbn: 1x1 conv(no bias) + BN
    s, b = _bn(cout)
    return {"w": _conv_w(1, 1, cin, cout), "scale": s, "bias": b}


def residual_params(cin, cout, stride=1):
    p = {"w1": _conv_w(3, 3, cin, cout), "w2": _conv_w(3, 3, cout, cout)}
    p["s1"], p["b1"] = _bn(cout)
    p["s2"], p["b2"] = _bn(cout)
    if stride != 1 or cin != cout:
        p["wskip"] = _conv_w(1, 1, cin, cout)
        p["sskip"], p["bskip"] = _bn(cout)
    return p


def residual_fwd(p, x, stride=1):
    if "wskip" in p:
        skip = conv2d(x, p["wskip"], p["sskip"], p["bskip"],
                      stride=stride, relu=False)
    else:
        skip = x
    y = conv2d(x, p["w1"], p["s1"], p["b1"], stride=stride, relu=True)
    # second conv fuses BN + residual add + ReLU in the matmul/conv epilogue
    return conv2d(y, p["w2"], p["s2"], p["b2"], stride=1, relu=True, skip=skip)


def hourglass_params(n, dims, mods):
    curr_dim, next_dim = dims[0], dims[1]
    curr_mod, next_mod = mods[0], mods[1]
    p = {}
    p["up1"] = [residual_params(curr_dim, curr_dim) for _ in range(curr_mod)]
    p["low1"] = ([residual_params(curr_dim, next_dim, stride=2)] +
                 [residual_params(next_dim, next_dim) for _ in range(curr_mod - 1)])
    if n > 1:
        p["low2"] = hourglass_params(n - 1, dims[1:], mods[1:])
    else:
        p["low2"] = [residual_params(next_dim, next_dim) for _ in range(next_mod)]
    p["low3"] = ([residual_params(next_dim, next_dim) for _ in range(curr_mod - 1)] +
                 [residual_params(next_dim, curr_dim)])
    return p


def hourglass_fwd(p, x):
    up1 = x
    for rp in p["up1"]:
        up1 = residual_fwd(rp, up1)
    low = x
    for i, rp in enumerate(p["low1"]):
        low = residual_fwd(rp, low, stride=2 if i == 0 else 1)
    if isinstance(p["low2"], dict):
        low = hourglass_fwd(p["low2"], low)
    else:
        for rp in p["low2"]:
            low = residual_fwd(rp, low)
    for rp in p["low3"]:
        low = residual_fwd(rp, low)
    up2 = upsample2x(low)
    return add_act(up1, up2, relu=False)


def cornerpool_params(dim):
    p = {"p1_conv1": convolution_params(dim, 128, 3),
         "p2_conv1": convolution_params(dim, 128, 3),
         "p_w": _conv_w(3, 3, 128, dim),
         "c1_w": _conv_w(1, 1, dim, dim),
         "conv2": convolution_params(dim, dim, 3)}
    p["p_s"], p["p_b"] = _bn(dim)
    p["c1_s"], p["c1_b"] = _bn(dim)
    return p


def cornerpool_fwd(p, x, rev_h, rev_w):
    p1 = convolution_fwd(p["p1_conv1"], x)
    p2 = convolution_fwd(p["p2_conv1"], x)
    m = _pool_merge_impl(p1, p2, rev_h=rev_h, rev_w=rev_w)   # pool1(p1)+pool2(p2)
    sb = conv2d(x, p["c1_w"], p["c1_s"], p["c1_b"], stride=1, relu=False)
    # p_conv/bn fused with the (+ bn1(conv1(x))) add and the ReLU
    y = conv2d(m, p["p_w"], p["p_s"], p["p_b"], stride=1, relu=True, skip=sb)
    return convolution_fwd(p["conv2"], y)


def predict_params(cin, cmid, cout):
    return {"conv": convolution_params(cin, cmid, 3, with_bn=False),
            "w": _conv_w(1, 1, cmid, cout),
            "s": jnp.ones((cout,), jnp.float32),
            "b": _bias_vec(cout)}


def corner_head_params(cin, cmid, classes):
    # heat / embd / offs heads merged into one 3x3 conv + one block-diag 1x1
    heads = [predict_params(cin, cmid, classes),
             predict_params(cin, cmid, 1),
             predict_params(cin, cmid, 2)]
    outs = [classes, 1, 2]
    total = sum(outs)
    w3 = jnp.concatenate([h["conv"]["w"] for h in heads], axis=3)
    s3 = jnp.concatenate([h["conv"]["scale"] for h in heads], axis=0)
    b3 = jnp.concatenate([h["conv"]["bias"] for h in heads], axis=0)
    w1 = jnp.zeros((3 * cmid, total), jnp.float32)
    r0, c0 = 0, 0
    for h, oc in zip(heads, outs):
        w1 = w1.at[r0:r0 + cmid, c0:c0 + oc].set(h["w"].reshape(cmid, oc))
        r0 += cmid
        c0 += oc
    b1 = jnp.concatenate([h["b"] for h in heads], axis=0)
    return {"w3": w3, "s3": s3, "b3": b3,
            "w1": w1.reshape(1, 1, 3 * cmid, total),
            "s1": jnp.ones((total,), jnp.float32), "b1": b1,
            "classes": classes}


def corner_head_fwd(p, x):
    classes = p["classes"]
    mid = conv2d(x, p["w3"], p["s3"], p["b3"], stride=1, relu=True)
    out = conv2d(mid, p["w1"], p["s1"], p["b1"], stride=1, relu=False)
    heat = out[..., :classes]
    embd = out[..., classes:classes + 1]
    offs = out[..., classes + 1:classes + 3]
    return heat, embd, offs


def intermediate_params(cin, cout):
    return {"resi": residual_params(cin, cout),
            "input": convbn_params(cin, cout),
            "output": convbn_params(cin, cout)}


def intermediate_fwd(p, x, y):
    a = conv2d(x, p["input"]["w"], p["input"]["scale"], p["input"]["bias"],
               stride=1, relu=False)
    # relu(a + b) fused into the second convbn epilogue
    c = conv2d(y, p["output"]["w"], p["output"]["scale"], p["output"]["bias"],
               stride=1, relu=True, skip=a)
    return residual_fwd(p["resi"], c)


def cornernet_params(classes=80):
    degree = 5
    feats = [256, 256, 384, 384, 384, 512]
    reps = [2, 2, 2, 2, 2, 4]
    p = {}
    p["in_conv"] = convolution_params(3, 128, 7)            # stride 2 at call
    p["in_res"] = residual_params(128, 256, stride=2)
    p["hourglass"] = [hourglass_params(degree, feats, reps) for _ in range(2)]
    p["outputs"] = [convolution_params(256, 256, 3) for _ in range(2)]
    p["intermediates"] = [intermediate_params(256, 256)]
    p["tl_pools"] = [cornerpool_params(256) for _ in range(2)]
    p["br_pools"] = [cornerpool_params(256) for _ in range(2)]
    p["tl_heads"] = [corner_head_params(256, 256, classes) for _ in range(2)]
    p["br_heads"] = [corner_head_params(256, 256, classes) for _ in range(2)]
    return p


def cornernet_fwd(p, x_nchw):
    x = jnp.transpose(x_nchw, (0, 2, 3, 1))        # NCHW -> NHWC (glue)
    # backbone stem
    x = convolution_fwd(p["in_conv"], x, stride=2)
    x = residual_fwd(p["in_res"], x, stride=2)
    outs = []
    for i in range(2):
        y = hourglass_fwd(p["hourglass"][i], x)
        y = convolution_fwd(p["outputs"][i], y)
        outs.append(y)
        if i == 1:
            break
        x = intermediate_fwd(p["intermediates"][i], x, y)
    feat = outs[-1]
    # top-left: TopPool (reverse along H) + LeftPool (reverse along W)
    tl_pool = cornerpool_fwd(p["tl_pools"][-1], feat, rev_h=True, rev_w=True)
    tl_heat, tl_embd, tl_offs = corner_head_fwd(p["tl_heads"][-1], tl_pool)
    # bottom-right: BottomPool (forward along H) + RightPool (forward along W)
    br_pool = cornerpool_fwd(p["br_pools"][-1], feat, rev_h=False, rev_w=False)
    br_heat, br_embd, br_offs = corner_head_fwd(p["br_heads"][-1], br_pool)
    to_nchw = lambda t: jnp.transpose(t, (0, 3, 1, 2))
    return tuple(to_nchw(t) for t in
                 (tl_heat, br_heat, tl_embd, br_embd, tl_offs, br_offs))


if __name__ == "__main__":
    # Smallest spatial size consistent with the module: the stem divides by 4
    # and the degree-5 hourglass divides by 32, so H=W must be a multiple of 128.
    classes = 80
    params = cornernet_params(classes=classes)
    key = jax.random.PRNGKey(0)
    x = jax.random.normal(key, (1, 3, 128, 128), dtype=jnp.float32)

    outs = cornernet_fwd(params, x)
    outs = jax.block_until_ready(outs)

    assert outs[0].shape == (1, classes, 32, 32)   # tl_heat
    assert outs[1].shape == (1, classes, 32, 32)   # br_heat
    assert outs[2].shape == (1, 1, 32, 32)         # tl_embd
    assert outs[3].shape == (1, 1, 32, 32)         # br_embd
    assert outs[4].shape == (1, 2, 32, 32)         # tl_offs
    assert outs[5].shape == (1, 2, 32, 32)         # br_offs
    print("KERNEL_OK")
</pallas_src>

<mosaic_0001>
module attributes {stable_mosaic.version = 11 : i64} {
  func.func @kernel(%arg0: i32, %arg1: i32, %arg2: i32, %arg3: memref<512x256xf32, #tpu.memory_space<vmem>>, %arg4: memref<256x128xf32, #tpu.memory_space<vmem>>, %arg5: memref<1x128xf32, #tpu.memory_space<vmem>>, %arg6: memref<1x128xf32, #tpu.memory_space<vmem>>, %arg7: memref<512x128xf32, #tpu.memory_space<vmem>>) attributes {dimension_semantics = [#tpu.dimension_semantics<parallel>, #tpu.dimension_semantics<parallel>, #tpu.dimension_semantics<arbitrary>], iteration_bounds = array<i64: 8, 1, 1>, scalar_prefetch = 0 : i64, scratch_operands = 0 : i64, tpu.core_type = #tpu.core_type<tc>, window_params = [{transform_indices = @transform_0, window_bounds = array<i64: 512, 256>}, {transform_indices = @transform_1, window_bounds = array<i64: 256, 128>}, {transform_indices = @transform_2, window_bounds = array<i64: 1, 128>}, {transform_indices = @transform_3, window_bounds = array<i64: 1, 128>}, {transform_indices = @transform_4, window_bounds = array<i64: 512, 128>}]} {
    %c0 = arith.constant 0 : index
    %c0_0 = arith.constant 0 : index
    %0 = vector.load %arg3[%c0, %c0_0] : memref<512x256xf32, #tpu.memory_space<vmem>>, vector<512x256xf32>
    %c0_1 = arith.constant 0 : index
    %c0_2 = arith.constant 0 : index
    %1 = vector.load %arg4[%c0_1, %c0_2] : memref<256x128xf32, #tpu.memory_space<vmem>>, vector<256x128xf32>
    %cst = arith.constant dense<0.000000e+00> : vector<512x128xf32>
    %2 = tpu.matmul %0, %1, %cst {dimension_numbers = #tpu.dot_dimension_numbers<[1], [0], [0], [1], [0, 0, 1, 1], [], []>} : vector<512x256xf32>, vector<256x128xf32>, vector<512x128xf32> -> vector<512x128xf32>
    %c0_i32 = arith.constant 0 : i32
    %3 = arith.cmpi eq, %arg2, %c0_i32 : i32
    %4 = arith.extui %3 : i1 to i32
    %c0_i32_3 = arith.constant 0 : i32
    %5 = arith.cmpi ne, %4, %c0_i32_3 : i32
    scf.if %5 {
      %c0_8 = arith.constant 0 : index
      %c0_9 = arith.constant 0 : index
      %12 = vector.load %arg7[%c0_8, %c0_9] : memref<512x128xf32, #tpu.memory_space<vmem>>, vector<512x128xf32>
      tpu.vector_store %arg7[%c0_8, %c0_9], %2 {strides = array<i32>} : memref<512x128xf32, #tpu.memory_space<vmem>>, vector<512x128xf32>,
    } else {
    }
    %c0_i32_4 = arith.constant 0 : i32
    %6 = arith.cmpi ne, %arg2, %c0_i32_4 : i32
    %7 = arith.extui %6 : i1 to i32
    %c0_i32_5 = arith.constant 0 : i32
    %8 = arith.cmpi ne, %7, %c0_i32_5 : i32
    scf.if %8 {
      %c0_8 = arith.constant 0 : index
      %c0_9 = arith.constant 0 : index
      %12 = vector.load %arg7[%c0_8, %c0_9] : memref<512x128xf32, #tpu.memory_space<vmem>>, vector<512x128xf32>
      %13 = arith.addf %12, %2 : vector<512x128xf32>
      %c0_10 = arith.constant 0 : index
      %c0_11 = arith.constant 0 : index
      %14 = vector.load %arg7[%c0_10, %c0_11] : memref<512x128xf32, #tpu.memory_space<vmem>>, vector<512x128xf32>
      tpu.vector_store %arg7[%c0_10, %c0_11], %13 {strides = array<i32>} : memref<512x128xf32, #tpu.memory_space<vmem>>, vector<512x128xf32>,
    } else {
    }
    %c0_i32_6 = arith.constant 0 : i32
    %9 = arith.cmpi eq, %arg2, %c0_i32_6 : i32
    %10 = arith.extui %9 : i1 to i32
    %c0_i32_7 = arith.constant 0 : i32
    %11 = arith.cmpi ne, %10, %c0_i32_7 : i32
    scf.if %11 {
      %c0_8 = arith.constant 0 : index
      %c0_9 = arith.constant 0 : index
      %12 = vector.load %arg7[%c0_8, %c0_9] : memref<512x128xf32, #tpu.memory_space<vmem>>, vector<512x128xf32>
      %c0_10 = arith.constant 0 : index
      %c0_11 = arith.constant 0 : index
      %13 = vector.load %arg5[%c0_10, %c0_11] : memref<1x128xf32, #tpu.memory_space<vmem>>, vector<1x128xf32>
      %14 = vector.broadcast %13 : vector<1x128xf32> to vector<512x128xf32>
      %15 = arith.mulf %12, %14 : vector<512x128xf32>
      %c0_12 = arith.constant 0 : index
      %c0_13 = arith.constant 0 : index
      %16 = vector.load %arg6[%c0_12, %c0_13] : memref<1x128xf32, #tpu.memory_space<vmem>>, vector<1x128xf32>
      %17 = vector.broadcast %16 : vector<1x128xf32> to vector<512x128xf32>
      %18 = arith.addf %15, %17 : vector<512x128xf32>
      %cst_14 = arith.constant 0.000000e+00 : f32
      %19 = vector.broadcast %cst_14 : f32 to vector<512x128xf32>
      %20 = arith.maximumf %18, %19 : vector<512x128xf32>
      %c0_15 = arith.constant 0 : index
      %c0_16 = arith.constant 0 : index
      %21 = vector.load %arg7[%c0_15, %c0_16] : memref<512x128xf32, #tpu.memory_space<vmem>>, vector<512x128xf32>
      tpu.vector_store %arg7[%c0_15, %c0_16], %20 {strides = array<i32>} : memref<512x128xf32, #tpu.memory_space<vmem>>, vector<512x128xf32>,
    } else {
    }
    return
  }
  func.func @transform_0(%arg0: i32, %arg1: i32, %arg2: i32) -> (i32, i32) {
    %c0_i32 = arith.constant 0 : i32
    return %arg0, %arg2 : i32, i32
  }
  func.func @transform_1(%arg0: i32, %arg1: i32, %arg2: i32) -> (i32, i32) {
    %c0_i32 = arith.constant 0 : i32
    return %arg2, %arg1 : i32, i32
  }
  func.func @transform_2(%arg0: i32, %arg1: i32, %arg2: i32) -> (i32, i32) {
    %c0_i32 = arith.constant 0 : i32
    %c0_i32_0 = arith.constant 0 : i32
    return %c0_i32, %arg1 : i32, i32
  }
  func.func @transform_3(%arg0: i32, %arg1: i32, %arg2: i32) -> (i32, i32) {
    %c0_i32 = arith.constant 0 : i32
    %c0_i32_0 = arith.constant 0 : i32
    return %c0_i32, %arg1 : i32, i32
  }
  func.func @transform_4(%arg0: i32, %arg1: i32, %arg2: i32) -> (i32, i32) {
    %c0_i32 = arith.constant 0 : i32
    return %arg0, %arg1 : i32, i32
  }
}

</mosaic_0001>

<llo_original>
// kernel: _conv2d_impl.1
$region0: #{_conv2d_impl.1}
  #allocation0 [shape = 'u32[]', space=smem, size = 0x4, offset = 0x4, fixed_abs, tag = 'smem constant byte address 0x4 - core index']
  #allocation1 [shape = 'u32[144,128]{1,0:T(1,128)}', space=vmem, size = 0x12000, scoped, tag = 'internal scratch']
  %s0 = inlined_call_operand.vmem [shape: f32[4096,256], index: 0, kind: input, shape index: {}]
  %s1 = inlined_call_operand.vmem [shape: f32[256,128], index: 1, kind: input, shape index: {}]
  %s2 = inlined_call_operand.vmem [shape: f32[1,128], index: 2, kind: input, shape index: {}]
  %s3 = inlined_call_operand.vmem [shape: f32[1,128], index: 3, kind: input, shape index: {}]
  %s4 = inlined_call_operand.hbm [shape: f32[4096,128], index: 4, kind: output, shape index: {}]
  %s5 = sld [smem:[#allocation0]]
  $region61: #{_conv2d_impl.1} parent=0
    _
  %s7 = ssub.s32 1, %s5
  %s8 = scalar_select 0, %s7, %s5
  $region1: #{_conv2d_impl.1} parent=0
    #allocation2 [shape = 'u8[524288]{0}', space=vmem, size = 0x80000, scoped, tag = 'output window, operand 0']
    #allocation3 [shape = 's32[2]{0}', space=sflag, size = 0x8, scoped, tag = 'scoped memory for _conv2d_impl.1']
    %9 = vsyncpa [#allocation3], 0
    %s10 = scalar_lea.sflag [#allocation3], 1
    %11 = vsyncpa %s10, 0
    loop: start=0, step=1, limit=10
    $region2: #{_conv2d_impl.1} parent=1 // loop_pre_header
      _
    $region3: #{_conv2d_impl.1} parent=1 // loop_header
      %s13 = sphi 0, %s17
      %p14 = scmp.ge.s32.totalorder %s13, 10
      %s20 = sphi 0, %s39
      %s21 = sphi 0, %s35
      %s22 = sphi 0, %s31
      %s23 = sphi 0, %s20
      %s24 = sphi 0, %s21
      %s25 = sphi 0, %s22
      %s26 = sphi 0, %s23
      %s27 = sphi 0, %s24
      %s28 = sphi 0, %s25
      %s44 = sphi 0, %s46
      %s47 = sphi 0, %s44
      %s48 = sphi 0, %s47
      %s64 = sphi 0, %s48
      %s72 = sphi 0, %s74
      %s75 = sphi 0, %s72
      %s76 = sphi 0, %s75
      %s92 = sphi 0, %s76
      %s98 = sphi 0, %s100
      %s101 = sphi 0, %s98
      %s102 = sphi 0, %s101
      %s118 = sphi 0, %s102
      %s124 = sphi 0, %s126
      %s127 = sphi 0, %s124
      %s128 = sphi 0, %s127
      %s144 = sphi 0, %s128
      %s152 = sphi 0, %s154
      %s155 = sphi 0, %s152
      %s156 = sphi 0, %s155
      %s172 = sphi 0, %s156
    $region4: #{_conv2d_impl.1} parent=1 // loop_header_branch
      %16 = sbr.rel (%p14) target = $region8
    $region5: #{_conv2d_impl.1} parent=1 // loop_body
      %s18 = ssub.s32 %s13, 1
      %s19 = ssub.s32 %s13, 2
      %s29 = sadd.s32 1, %s22
      %p30 = scmp.ge.s32.totalorder %s29, 1
      %s31 = scalar_select %p30, 0, %s29
      %s32 = sadd.s32 1, %s21
      %s33 = scalar_select %p30, %s32, %s21
      %p34 = scmp.ge.s32.totalorder %s33, 1
      %s35 = scalar_select %p34, 0, %s33
      %s36 = sadd.s32 1, %s20
      %s37 = scalar_select %p34, %s36, %s20
      %p38 = scmp.ge.s32.totalorder %s37, 8
      %s39 = scalar_select %p38, 0, %s37
      %s40 = ssub.s32 %s20, %s39
      %s41 = ssub.s32 %s22, %s31
      %s42 = sor.u32 %s40, %s41
      %p43 = scmp.eq.s32.totalorder %s42, 0
      %s45 = sadd.s32 %s44, 1
      %s46 = scalar_select %p43, %s44, %s45
      %p49 = pneg %p43
      %p50 = scmp.eq.s32.totalorder %s13, 7
      %p51 = por %p49, %p50
      %p52 = scmp.ne.s32.totalorder %s44, %s47
      %p53 = scmp.eq.s32.totalorder %s13, 0
      %p54 = por %p52, %p53
      %p55 = scmp.ne.s32.totalorder %s44, %s47
      %p56 = scmp.eq.s32.totalorder %s18, 7
      %p57 = por %p55, %p56
      %p58 = scmp.ne.s32.totalorder %s47, %s48
      %p59 = scmp.eq.s32.totalorder %s18, 0
      %p60 = por %p58, %p59
      %p61 = scmp.ne.s32.totalorder %s47, %s48
      %p62 = scmp.eq.s32.totalorder %s19, 7
      %p63 = por %p61, %p62
      %p65 = scmp.ne.s32.totalorder %s48, %s64
      %p66 = scmp.eq.s32.totalorder %s19, 0
      %p67 = por %p65, %p66
      %s68 = ssub.s32 %s22, %s31
      %s69 = ssub.s32 %s21, %s35
      %s70 = sor.u32 %s68, %s69
      %p71 = scmp.eq.s32.totalorder %s70, 0
      %s73 = sadd.s32 %s72, 1
      %s74 = scalar_select %p71, %s72, %s73
      %p77 = pneg %p71
      %p78 = scmp.eq.s32.totalorder %s13, 7
      %p79 = por %p77, %p78
      %p80 = scmp.ne.s32.totalorder %s72, %s75
      %p81 = scmp.eq.s32.totalorder %s13, 0
      %p82 = por %p80, %p81
      %p83 = scmp.ne.s32.totalorder %s72, %s75
      %p84 = scmp.eq.s32.totalorder %s18, 7
      %p85 = por %p83, %p84
      %p86 = scmp.ne.s32.totalorder %s75, %s76
      %p87 = scmp.eq.s32.totalorder %s18, 0
      %p88 = por %p86, %p87
      %p89 = scmp.ne.s32.totalorder %s75, %s76
      %p90 = scmp.eq.s32.totalorder %s19, 7
      %p91 = por %p89, %p90
      %p93 = scmp.ne.s32.totalorder %s76, %s92
      %p94 = scmp.eq.s32.totalorder %s19, 0
      %p95 = por %p93, %p94
      %s96 = ssub.s32 %s21, %s35
      %p97 = scmp.eq.s32.totalorder %s96, 0
      %s99 = sadd.s32 %s98, 1
      %s100 = scalar_select %p97, %s98, %s99
      %p103 = pneg %p97
      %p104 = scmp.eq.s32.totalorder %s13, 7
      %p105 = por %p103, %p104
      %p106 = scmp.ne.s32.totalorder %s98, %s101
      %p107 = scmp.eq.s32.totalorder %s13, 0
      %p108 = por %p106, %p107
      %p109 = scmp.ne.s32.totalorder %s98, %s101
      %p110 = scmp.eq.s32.totalorder %s18, 7
      %p111 = por %p109, %p110
      %p112 = scmp.ne.s32.totalorder %s101, %s102
      %p113 = scmp.eq.s32.totalorder %s18, 0
      %p114 = por %p112, %p113
      %p115 = scmp.ne.s32.totalorder %s101, %s102
      %p116 = scmp.eq.s32.totalorder %s19, 7
      %p117 = por %p115, %p116
      %p119 = scmp.ne.s32.totalorder %s102, %s118
      %p120 = scmp.eq.s32.totalorder %s19, 0
      %p121 = por %p119, %p120
      %s122 = ssub.s32 %s21, %s35
      %p123 = scmp.eq.s32.totalorder %s122, 0
      %s125 = sadd.s32 %s124, 1
      %s126 = scalar_select %p123, %s124, %s125
      %p129 = pneg %p123
      %p130 = scmp.eq.s32.totalorder %s13, 7
      %p131 = por %p129, %p130
      %p132 = scmp.ne.s32.totalorder %s124, %s127
      %p133 = scmp.eq.s32.totalorder %s13, 0
      %p134 = por %p132, %p133
      %p135 = scmp.ne.s32.totalorder %s124, %s127
      %p136 = scmp.eq.s32.totalorder %s18, 7
      %p137 = por %p135, %p136
      %p138 = scmp.ne.s32.totalorder %s127, %s128
      %p139 = scmp.eq.s32.totalorder %s18, 0
      %p140 = por %p138, %p139
      %p141 = scmp.ne.s32.totalorder %s127, %s128
      %p142 = scmp.eq.s32.totalorder %s19, 7
      %p143 = por %p141, %p142
      %p145 = scmp.ne.s32.totalorder %s128, %s144
      %p146 = scmp.eq.s32.totalorder %s19, 0
      %p147 = por %p145, %p146
      %s148 = ssub.s32 %s20, %s39
      %s149 = ssub.s32 %s21, %s35
      %s150 = sor.u32 %s148, %s149
      %p151 = scmp.eq.s32.totalorder %s150, 0
      %s153 = sadd.s32 %s152, 1
      %s154 = scalar_select %p151, %s152, %s153
      %p157 = pneg %p151
      %p158 = scmp.eq.s32.totalorder %s13, 7
      %p159 = por %p157, %p158
      %p160 = scmp.ne.s32.totalorder %s152, %s155
      %p161 = scmp.eq.s32.totalorder %s13, 0
      %p162 = por %p160, %p161
      %p163 = scmp.ne.s32.totalorder %s152, %s155
      %p164 = scmp.eq.s32.totalorder %s18, 7
      %p165 = por %p163, %p164
      %p166 = scmp.ne.s32.totalorder %s155, %s156
      %p167 = scmp.eq.s32.totalorder %s18, 0
      %p168 = por %p166, %p167
      %p169 = scmp.ne.s32.totalorder %s155, %s156
      %p170 = scmp.eq.s32.totalorder %s19, 7
      %p171 = por %p169, %p170
      %p173 = scmp.ne.s32.totalorder %s156, %s172
      %p174 = scmp.eq.s32.totalorder %s19, 0
      %p175 = por %p173, %p174
      %p176 = scmp.le.s32.totalorder 1, %s13
      %p177 = scmp.lt.s32.totalorder %s13, 9
      %p178 = pnand %p176, %p177
      %p179 = pneg %p178
      // Predicated region
      $region9: #{_conv2d_impl.1} parent=5 // pred_check
        _
      $region10: #{_conv2d_impl.1} parent=5 // pred_check_branch
        %181 = sbr.rel (%p178) target = $region12
      $region11: #{_conv2d_impl.1} parent=5 // pred_region
        %s182 = ssub.s32 %s13, 1
        // Predicated region
        $region13: #{_conv2d_impl.1} parent=11 // pred_check
          %p183 = pneg %p88
        $region14: #{_conv2d_impl.1} parent=11 // pred_check_branch
          %185 = sbr.rel (%p183) target = $region16
        $region15: #{_conv2d_impl.1} parent=11 // pred_region
          %s186 = smul.u32 32, %s25
          %p187 = scmp.lt.s32.totalorder %s186, 31
          %s188 = scalar_select %p187, %s186, 31
          %p189 = scmp.lt.s32.totalorder %s24, 0
          %s190 = scalar_select %p189, %s24, 0
          %s191 = sadd.s32 %s190, %s188
          %s192 = smul.addr %s191, 8
          %s193 = scalar_lea.vmem %s1, %s192
          %s194 = smul.u32 32, %s25
        $region16: #{_conv2d_impl.1} parent=11 // pred_fallthru
          _
        // Predicated region
        $region17: #{_conv2d_impl.1} parent=11 // pred_check
          %p195 = pneg %p114
        $region18: #{_conv2d_impl.1} parent=11 // pred_check_branch
          %197 = sbr.rel (%p195) target = $region20
        $region19: #{_conv2d_impl.1} parent=11 // pred_region
          %p198 = scmp.lt.s32.totalorder %s24, 0
          %s199 = scalar_select %p198, %s24, 0
          %s200 = scalar_lea.vmem %s2, %s199
        $region20: #{_conv2d_impl.1} parent=11 // pred_fallthru
          _
        // Predicated region
        $region21: #{_conv2d_impl.1} parent=11 // pred_check
          %p201 = pneg %p140
        $region22: #{_conv2d_impl.1} parent=11 // pred_check_branch
          %203 = sbr.rel (%p201) target = $region24
        $region23: #{_conv2d_impl.1} parent=11 // pred_region
          %p204 = scmp.lt.s32.totalorder %s24, 0
          %s205 = scalar_select %p204, %s24, 0
          %s206 = scalar_lea.vmem %s3, %s205
        $region24: #{_conv2d_impl.1} parent=11 // pred_fallthru
          _
      $region12: #{_conv2d_impl.1} parent=5 // pred_fallthru
        _
      %p207 = scmp.lt.s32.totalorder %s13, 8
      // Predicated region
      $region25: #{_conv2d_impl.1} parent=5 // pred_check
        %p208 = pneg %p207
      $region26: #{_conv2d_impl.1} parent=5 // pred_check_branch
        %210 = sbr.rel (%p208) target = $region28
      $region27: #{_conv2d_impl.1} parent=5 // pred_region
        // Predicated region
        $region29: #{_conv2d_impl.1} parent=27 // pred_check
          %p211 = pneg %p54
        $region30: #{_conv2d_impl.1} parent=27 // pred_check_branch
          %213 = sbr.rel (%p211) target = $region32
        $region31: #{_conv2d_impl.1} parent=27 // pred_region
          %s214 = smul.u32 64, %s20
          %s215 = smul.u32 2, %s22
          %p216 = scmp.lt.s32.totalorder %s214, 511
          %s217 = scalar_select %p216, %s214, 511
          %p218 = scmp.lt.s32.totalorder %s215, 1
          %s219 = scalar_select %p218, %s215, 1
          %s220 = smul.addr %s217, 2
          %s221 = sadd.s32 %s219, %s220
          %s222 = smul.addr %s221, 8
          %s223 = scalar_lea.vmem %s0, %s222
          %s224 = smul.u32 64, %s20
          %s225 = smul.u32 2, %s22
        $region32: #{_conv2d_impl.1} parent=27 // pred_fallthru
          _
      $region28: #{_conv2d_impl.1} parent=5 // pred_fallthru
        _
      %p226 = scmp.le.s32.totalorder 1, %s13
      %p227 = scmp.lt.s32.totalorder %s13, 9
      %p228 = pnand %p226, %p227
      %p229 = pneg %p228
      // Predicated region
      $region33: #{_conv2d_impl.1} parent=5 // pred_check
        _
      $region34: #{_conv2d_impl.1} parent=5 // pred_check_branch
        %231 = sbr.rel (%p228) target = $region36
      $region35: #{_conv2d_impl.1} parent=5 // pred_region
        %s232 = ssub.s32 %s13, 1
        %s233 = smul.u32 64, %s23
        %s234 = smul.u32 2, %s25
        %p235 = scmp.lt.s32.totalorder %s233, 511
        %s236 = scalar_select %p235, %s233, 511
        %p237 = scmp.lt.s32.totalorder %s234, 1
        %s238 = scalar_select %p237, %s234, 1
        %s239 = smul.addr %s236, 2
        %s240 = sadd.s32 %s238, %s239
        %s241 = smul.addr %s240, 8
        %s242 = scalar_lea.vmem %s0, %s241
        %p243 = pneg %p60
        %p244 = pneg %p57
        %s245 = smul.u32 32, %s25
        %p246 = scmp.lt.s32.totalorder %s245, 31
        %s247 = scalar_select %p246, %s245, 31
        %p248 = scmp.lt.s32.totalorder %s24, 0
        %s249 = scalar_select %p248, %s24, 0
        %s250 = sadd.s32 %s249, %s247
        %s251 = smul.addr %s250, 8
        %s252 = scalar_lea.vmem %s1, %s251
        %p253 = pneg %p88
        %p254 = pneg %p85
        %p255 = scmp.lt.s32.totalorder %s24, 0
        %s256 = scalar_select %p255, %s24, 0
        %s257 = scalar_lea.vmem %s2, %s256
        %p258 = pneg %p114
        %p259 = pneg %p111
        %p260 = scmp.lt.s32.totalorder %s24, 0
        %s261 = scalar_select %p260, %s24, 0
        %s262 = scalar_lea.vmem %s3, %s261
        %p263 = pneg %p140
        %p264 = pneg %p137
        %p265 = pneg %p168
        %p266 = pneg %p165
        %s267 = sand.u32 %s155, 1
        %s268 = scalar_lea.sflag [#allocation3], %s267
        %s269 = sand.u32 %s155, 1
        %s270 = smul.addr %s269, 512
        %s271 = scalar_lea.vmem [#allocation2], %s270
        %s272 = smul.u32 64, %s23
        %s273 = smul.u32 2, %s25
        %p274 = scmp.lt.s32.totalorder %s272, 511
        %s275 = scalar_select %p274, %s272, 511
        %p276 = scmp.lt.s32.totalorder %s273, 1
        %s277 = scalar_select %p276, %s273, 1
        %s278 = smul.addr %s275, 2
        %s279 = sadd.s32 %s277, %s278
        %s280 = smul.addr %s279, 8
        %s281 = scalar_lea.vmem %s0, %s280
        %s282 = smul.u32 64, %s23
        %s283 = smul.u32 2, %s25
        %s284 = smul.u32 32, %s25
        %p285 = scmp.lt.s32.totalorder %s284, 31
        %s286 = scalar_select %p285, %s284, 31
        %p287 = scmp.lt.s32.totalorder %s24, 0
        %s288 = scalar_select %p287, %s24, 0
        %s289 = sadd.s32 %s288, %s286
        %s290 = smul.addr %s289, 8
        %s291 = scalar_lea.vmem %s1, %s290
        %s292 = smul.u32 32, %s25
        %p293 = scmp.lt.s32.totalorder %s24, 0
        %s294 = scalar_select %p293, %s24, 0
        %s295 = scalar_lea.vmem %s2, %s294
        %p296 = scmp.lt.s32.totalorder %s24, 0
        %s297 = scalar_select %p296, %s24, 0
        %s298 = scalar_lea.vmem %s3, %s297
        %s299 = smul.u32 64, %s23
        %v300 = vld [vmem:[%s281] sm:$0xff]
        %v301 = vld [vmem:[%s281 + $0x8] sm:$0xff]
        %v302 = vld [vmem:[%s281 + $0x10] sm:$0xff]
        %v303 = vld [vmem:[%s281 + $0x18] sm:$0xff]
        %v304 = vld [vmem:[%s281 + $0x20] sm:$0xff]
        %v305 = vld [vmem:[%s281 + $0x28] sm:$0xff]
        %v306 = vld [vmem:[%s281 + $0x30] sm:$0xff]
        %v307 = vld [vmem:[%s281 + $0x38] sm:$0xff]
        %v308 = vld [vmem:[%s281 + $0x40] sm:$0xff]
        %v309 = vld [vmem:[%s281 + $0x48] sm:$0xff]
        %v310 = vld [vmem:[%s281 + $0x50] sm:$0xff]
        %v311 = vld [vmem:[%s281 + $0x58] sm:$0xff]
        %v312 = vld [vmem:[%s281 + $0x60] sm:$0xff]
        %v313 = vld [vmem:[%s281 + $0x68] sm:$0xff]
        %v314 = vld [vmem:[%s281 + $0x70] sm:$0xff]
        %v315 = vld [vmem:[%s281 + $0x78] sm:$0xff]
        %v316 = vld [vmem:[%s281 + $0x80] sm:$0xff]
        %v317 = vld [vmem:[%s281 + $0x88] sm:$0xff]
        %v318 = vld [vmem:[%s281 + $0x90] sm:$0xff]
        %v319 = vld [vmem:[%s281 + $0x98] sm:$0xff]
        %v320 = vld [vmem:[%s281 + $0xa0] sm:$0xff]
        %v321 = vld [vmem:[%s281 + $0xa8] sm:$0xff]
        %v322 = vld [vmem:[%s281 + $0xb0] sm:$0xff]
        %v323 = vld [vmem:[%s281 + $0xb8] sm:$0xff]
        %v324 = vld [vmem:[%s281 + $0xc0] sm:$0xff]
        %v325 = vld [vmem:[%s281 + $0xc8] sm:$0xff]
        %v326 = vld [vmem:[%s281 + $0xd0] sm:$0xff]
        %v327 = vld [vmem:[%s281 + $0xd8] sm:$0xff]
        %v328 = vld [vmem:[%s281 + $0xe0] sm:$0xff]
        %v329 = vld [vmem:[%s281 + $0xe8] sm:$0xff]
        %v330 = vld [vmem:[%s281 + $0xf0] sm:$0xff]
        %v331 = vld [vmem:[%s281 + $0xf8] sm:$0xff]
        %v332 = vld [vmem:[%s281 + $0x100] sm:$0xff]
        %v333 = vld [vmem:[%s281 + $0x108] sm:$0xff]
        %v334 = vld [vmem:[%s281 + $0x110] sm:$0xff]
        %v335 = vld [vmem:[%s281 + $0x118] sm:$0xff]
        %v336 = vld [vmem:[%s281 + $0x120] sm:$0xff]
        %v337 = vld [vmem:[%s281 + $0x128] sm:$0xff]
        %v338 = vld [vmem:[%s281 + $0x130] sm:$0xff]
        %v339 = vld [vmem:[%s281 + $0x138] sm:$0xff]
        %v340 = vld [vmem:[%s281 + $0x140] sm:$0xff]
        %v341 = vld [vmem:[%s281 + $0x148] sm:$0xff]
        %v342 = vld [vmem:[%s281 + $0x150] sm:$0xff]
        %v343 = vld [vmem:[%s281 + $0x158] sm:$0xff]
        %v344 = vld [vmem:[%s281 + $0x160] sm:$0xff]
        %v345 = vld [vmem:[%s281 + $0x168] sm:$0xff]
        %v346 = vld [vmem:[%s281 + $0x170] sm:$0xff]
        %v347 = vld [vmem:[%s281 + $0x178] sm:$0xff]
        %v348 = vld [vmem:[%s281 + $0x180] sm:$0xff]
        %v349 = vld [vmem:[%s281 + $0x188] sm:$0xff]
        %v350 = vld [vmem:[%s281 + $0x190] sm:$0xff]
        %v351 = vld [vmem:[%s281 + $0x198] sm:$0xff]
        %v352 = vld [vmem:[%s281 + $0x1a0] sm:$0xff]
        %v353 = vld [vmem:[%s281 + $0x1a8] sm:$0xff]
        %v354 = vld [vmem:[%s281 + $0x1b0] sm:$0xff]
        %v355 = vld [vmem:[%s281 + $0x1b8] sm:$0xff]
        %v356 = vld [vmem:[%s281 + $0x1c0] sm:$0xff]
        %v357 = vld [vmem:[%s281 + $0x1c8] sm:$0xff]
        %v358 = vld [vmem:[%s281 + $0x1d0] sm:$0xff]
        %v359 = vld [vmem:[%s281 + $0x1d8] sm:$0xff]
        %v360 = vld [vmem:[%s281 + $0x1e0] sm:$0xff]
        %v361 = vld [vmem:[%s281 + $0x1e8] sm:$0xff]
        %v362 = vld [vmem:[%s281 + $0x1f0] sm:$0xff]
        %v363 = vld [vmem:[%s281 + $0x1f8] sm:$0xff]
        %v364 = vld [vmem:[%s281 + $0x200] sm:$0xff]
        %v365 = vld [vmem:[%s281 + $0x208] sm:$0xff]
        %v366 = vld [vmem:[%s281 + $0x210] sm:$0xff]
        %v367 = vld [vmem:[%s281 + $0x218] sm:$0xff]
        %v368 = vld [vmem:[%s281 + $0x220] sm:$0xff]
        %v369 = vld [vmem:[%s281 + $0x228] sm:$0xff]
        %v370 = vld [vmem:[%s281 + $0x230] sm:$0xff]
        %v371 = vld [vmem:[%s281 + $0x238] sm:$0xff]
        %v372 = vld [vmem:[%s281 + $0x240] sm:$0xff]
        %v373 = vld [vmem:[%s281 + $0x248] sm:$0xff]
        %v374 = vld [vmem:[%s281 + $0x250] sm:$0xff]
        %v375 = vld [vmem:[%s281 + $0x258] sm:$0xff]
        %v376 = vld [vmem:[%s281 + $0x260] sm:$0xff]
        %v377 = vld [vmem:[%s281 + $0x268] sm:$0xff]
        %v378 = vld [vmem:[%s281 + $0x270] sm:$0xff]
        %v379 = vld [vmem:[%s281 + $0x278] sm:$0xff]
        %v380 = vld [vmem:[%s281 + $0x280] sm:$0xff]
        %v381 = vld [vmem:[%s281 + $0x288] sm:$0xff]
        %v382 = vld [vmem:[%s281 + $0x290] sm:$0xff]
        %v383 = vld [vmem:[%s281 + $0x298] sm:$0xff]
        %v384 = vld [vmem:[%s281 + $0x2a0] sm:$0xff]
        %v385 = vld [vmem:[%s281 + $0x2a8] sm:$0xff]
        %v386 = vld [vmem:[%s281 + $0x2b0] sm:$0xff]
        %v387 = vld [vmem:[%s281 + $0x2b8] sm:$0xff]
        %v388 = vld [vmem:[%s281 + $0x2c0] sm:$0xff]
        %v389 = vld [vmem:[%s281 + $0x2c8] sm:$0xff]
        %v390 = vld [vmem:[%s281 + $0x2d0] sm:$0xff]
        %v391 = vld [vmem:[%s281 + $0x2d8] sm:$0xff]
        %v392 = vld [vmem:[%s281 + $0x2e0] sm:$0xff]
        %v393 = vld [vmem:[%s281 + $0x2e8] sm:$0xff]
        %v394 = vld [vmem:[%s281 + $0x2f0] sm:$0xff]
        %v395 = vld [vmem:[%s281 + $0x2f8] sm:$0xff]
        %v396 = vld [vmem:[%s281 + $0x300] sm:$0xff]
        %v397 = vld [vmem:[%s281 + $0x308] sm:$0xff]
        %v398 = vld [vmem:[%s281 + $0x310] sm:$0xff]
        %v399 = vld [vmem:[%s281 + $0x318] sm:$0xff]
        %v400 = vld [vmem:[%s281 + $0x320] sm:$0xff]
        %v401 = vld [vmem:[%s281 + $0x328] sm:$0xff]
        %v402 = vld [vmem:[%s281 + $0x330] sm:$0xff]
        %v403 = vld [vmem:[%s281 + $0x338] sm:$0xff]
        %v404 = vld [vmem:[%s281 + $0x340] sm:$0xff]
        %v405 = vld [vmem:[%s281 + $0x348] sm:$0xff]
        %v406 = vld [vmem:[%s281 + $0x350] sm:$0xff]
        %v407 = vld [vmem:[%s281 + $0x358] sm:$0xff]
        %v408 = vld [vmem:[%s281 + $0x360] sm:$0xff]
        %v409 = vld [vmem:[%s281 + $0x368] sm:$0xff]
        %v410 = vld [vmem:[%s281 + $0x370] sm:$0xff]
        %v411 = vld [vmem:[%s281 + $0x378] sm:$0xff]
        %v412 = vld [vmem:[%s281 + $0x380] sm:$0xff]
        %v413 = vld [vmem:[%s281 + $0x388] sm:$0xff]
        %v414 = vld [vmem:[%s281 + $0x390] sm:$0xff]
        %v415 = vld [vmem:[%s281 + $0x398] sm:$0xff]
        %v416 = vld [vmem:[%s281 + $0x3a0] sm:$0xff]
        %v417 = vld [vmem:[%s281 + $0x3a8] sm:$0xff]
        %v418 = vld [vmem:[%s281 + $0x3b0] sm:$0xff]
        %v419 = vld [vmem:[%s281 + $0x3b8] sm:$0xff]
        %v420 = vld [vmem:[%s281 + $0x3c0] sm:$0xff]
        %v421 = vld [vmem:[%s281 + $0x3c8] sm:$0xff]
        %v422 = vld [vmem:[%s281 + $0x3d0] sm:$0xff]
        %v423 = vld [vmem:[%s281 + $0x3d8] sm:$0xff]
        %v424 = vld [vmem:[%s281 + $0x3e0] sm:$0xff]
        %v425 = vld [vmem:[%s281 + $0x3e8] sm:$0xff]
        %v426 = vld [vmem:[%s281 + $0x3f0] sm:$0xff]
        %v427 = vld [vmem:[%s281 + $0x3f8] sm:$0xff]
        %v428 = vld [vmem:[%s291] sm:$0xff]
        %v429 = vld [vmem:[%s291 + $0x8] sm:$0xff]
        %v430 = vld [vmem:[%s291 + $0x10] sm:$0xff]
        %v431 = vld [vmem:[%s291 + $0x18] sm:$0xff]
        %v432 = vld [vmem:[%s291 + $0x20] sm:$0xff]
        %v433 = vld [vmem:[%s291 + $0x28] sm:$0xff]
        %v434 = vld [vmem:[%s291 + $0x30] sm:$0xff]
        %v435 = vld [vmem:[%s291 + $0x38] sm:$0xff]
        %v436 = vld [vmem:[%s291 + $0x40] sm:$0xff]
        %v437 = vld [vmem:[%s291 + $0x48] sm:$0xff]
        %v438 = vld [vmem:[%s291 + $0x50] sm:$0xff]
        %v439 = vld [vmem:[%s291 + $0x58] sm:$0xff]
        %v440 = vld [vmem:[%s291 + $0x60] sm:$0xff]
        %v441 = vld [vmem:[%s291 + $0x68] sm:$0xff]
        %v442 = vld [vmem:[%s291 + $0x70] sm:$0xff]
        %v443 = vld [vmem:[%s291 + $0x78] sm:$0xff]
        %v444 = vld [vmem:[%s291 + $0x80] sm:$0xff]
        %v445 = vld [vmem:[%s291 + $0x88] sm:$0xff]
        %v446 = vld [vmem:[%s291 + $0x90] sm:$0xff]
        %v447 = vld [vmem:[%s291 + $0x98] sm:$0xff]
        %v448 = vld [vmem:[%s291 + $0xa0] sm:$0xff]
        %v449 = vld [vmem:[%s291 + $0xa8] sm:$0xff]
        %v450 = vld [vmem:[%s291 + $0xb0] sm:$0xff]
        %v451 = vld [vmem:[%s291 + $0xb8] sm:$0xff]
        %v452 = vld [vmem:[%s291 + $0xc0] sm:$0xff]
        %v453 = vld [vmem:[%s291 + $0xc8] sm:$0xff]
        %v454 = vld [vmem:[%s291 + $0xd0] sm:$0xff]
        %v455 = vld [vmem:[%s291 + $0xd8] sm:$0xff]
        %v456 = vld [vmem:[%s291 + $0xe0] sm:$0xff]
        %v457 = vld [vmem:[%s291 + $0xe8] sm:$0xff]
        %v458 = vld [vmem:[%s291 + $0xf0] sm:$0xff]
        %v459 = vld [vmem:[%s291 + $0xf8] sm:$0xff]
        %460 = vmatprep.subr.mxu0 0.0
        %461 = vmatpush1.msra.mxu0 %v428
        %462 = vmatprep.subr.mxu0 0.0
        %463 = vmatpush1.msra.mxu0 %v429
        %464 = vmatprep.subr.mxu0 0.0
        %465 = vmatpush1.msra.mxu0 %v430
        %466 = vmatprep.subr.mxu0 0.0
        %467 = vmatpush1.msra.mxu0 %v431
        %468 = vmatprep.subr.mxu0 0.0
        %469 = vmatpush1.msra.mxu0 %v432
        %470 = vmatprep.subr.mxu0 0.0
        %471 = vmatpush1.msra.mxu0 %v433
        %472 = vmatprep.subr.mxu0 0.0
        %473 = vmatpush1.msra.mxu0 %v434
        %474 = vmatprep.subr.mxu0 0.0
        %475 = vmatpush1.msra.mxu0 %v435
        %476 = vmatprep.subr.mxu0 0.0
        %477 = vmatpush1.msra.mxu0 %v436
        %478 = vmatprep.subr.mxu0 0.0
        %479 = vmatpush1.msra.mxu0 %v437
        %480 = vmatprep.subr.mxu0 0.0
        %481 = vmatpush1.msra.mxu0 %v438
        %482 = vmatprep.subr.mxu0 0.0
        %483 = vmatpush1.msra.mxu0 %v439
        %484 = vmatprep.subr.mxu0 0.0
        %485 = vmatpush1.msra.mxu0 %v440
        %486 = vmatprep.subr.mxu0 0.0
        %487 = vmatpush1.msra.mxu0 %v441
        %488 = vmatprep.subr.mxu0 0.0
        %489 = vmatpush1.msra.mxu0 %v442
        %490 = vmatprep.subr.mxu0 0.0
        %491 = vmatpush1.msra.mxu0 %v443
        %492 = vmatprep.subr.mxu0 0.0
        %493 = vmatpush1.msra.mxu0 %v444
        %494 = vmatprep.subr.mxu0 0.0
        %495 = vmatpush1.msra.mxu0 %v445
        %496 = vmatprep.subr.mxu0 0.0
        %497 = vmatpush1.msra.mxu0 %v446
        %498 = vmatprep.subr.mxu0 0.0
        %499 = vmatpush1.msra.mxu0 %v447
        %500 = vmatprep.subr.mxu0 0.0
        %501 = vmatpush1.msra.mxu0 %v448
        %502 = vmatprep.subr.mxu0 0.0
        %503 = vmatpush1.msra.mxu0 %v449
        %504 = vmatprep.subr.mxu0 0.0
        %505 = vmatpush1.msra.mxu0 %v450
        %506 = vmatprep.subr.mxu0 0.0
        %507 = vmatpush1.msra.mxu0 %v451
        %508 = vmatprep.subr.mxu0 0.0
        %509 = vmatpush1.msra.mxu0 %v452
        %510 = vmatprep.subr.mxu0 0.0
        %511 = vmatpush1.msra.mxu0 %v453
        %512 = vmatprep.subr.mxu0 0.0
        %513 = vmatpush1.msra.mxu0 %v454
        %514 = vmatprep.subr.mxu0 0.0
        %515 = vmatpush1.msra.mxu0 %v455
        %516 = vmatprep.subr.mxu0 0.0
        %517 = vmatpush1.msra.mxu0 %v456
        %518 = vmatprep.subr.mxu0 0.0
        %519 = vmatpush1.msra.mxu0 %v457
        %520 = vmatprep.subr.mxu0 0.0
        %521 = vmatpush1.msra.mxu0 %v458
        %522 = vmatprep.subr.mxu0 0.0
        %523 = vmatpush1.msra.mxu0 %v459
        %524 = vmatprep.mubr.f32.mxu0 %v301
        %525 = vmatmul.mubr.f32.gmra.mrb[0].mxu0 %v300
        %v526 = vpop.f32.mrb[0].mxu0
        %v527 = vadd.f32 0.0, %v526
        %v528 = vpop.f32.mrb[0].mxu0
        %529 = vmatprep.mubr.f32.mxu0 %v303
        %530 = vmatmul.mubr.f32.gmra.mrb[0].mxu0 %v302
        %v531 = vpop.f32.mrb[0].mxu0
        %v532 = vadd.f32 0.0, %v531
        %v533 = vpop.f32.mrb[0].mxu0
        %534 = vmatprep.mubr.f32.mxu0 %v305
        %535 = vmatmul.mubr.f32.gmra.mrb[0].mxu0 %v304
        %v536 = vpop.f32.mrb[0].mxu0
        %v537 = vadd.f32 0.0, %v536
        %v538 = vpop.f32.mrb[0].mxu0
        %539 = vmatprep.mubr.f32.mxu0 %v307
        %540 = vmatmul.mubr.f32.gmra.mrb[0].mxu0 %v306
        %v541 = vpop.f32.mrb[0].mxu0
        %v542 = vadd.f32 0.0, %v541
        %v543 = vpop.f32.mrb[0].mxu0
        %544 = vmatprep.mubr.f32.mxu0 %v309
        %545 = vmatmul.mubr.f32.gmra.mrb[0].mxu0 %v308
        %v546 = vpop.f32.mrb[0].mxu0
        %v547 = vadd.f32 0.0, %v546
        %v548 = vpop.f32.mrb[0].mxu0
        %549 = vmatprep.mubr.f32.mxu0 %v311
        %550 = vmatmul.mubr.f32.gmra.mrb[0].mxu0 %v310
        %v551 = vpop.f32.mrb[0].mxu0
        %v552 = vadd.f32 0.0, %v551
        %v553 = vpop.f32.mrb[0].mxu0
        %554 = vmatprep.mubr.f32.mxu0 %v313
        %555 = vmatmul.mubr.f32.gmra.mrb[0].mxu0 %v312
        %v556 = vpop.f32.mrb[0].mxu0
        %v557 = vadd.f32 0.0, %v556
        %v558 = vpop.f32.mrb[0].mxu0
        %559 = vmatprep.mubr.f32.mxu0 %v315
        %560 = vmatmul.mubr.f32.gmra.mrb[0].mxu0 %v314
        %v561 = vpop.f32.mrb[0].mxu0
        %v562 = vadd.f32 0.0, %v561
        %v563 = vpop.f32.mrb[0].mxu0
        %564 = vmatprep.mubr.f32.mxu0 %v317
        %565 = vmatmul.mubr.f32.gmra.mrb[0].mxu0 %v316
        %v566 = vpop.f32.mrb[0].mxu0
        %v567 = vadd.f32 0.0, %v566
        %v568 = vpop.f32.mrb[0].mxu0
        %569 = vmatprep.mubr.f32.mxu0 %v319
        %570 = vmatmul.mubr.f32.gmra.mrb[0].mxu0 %v318
        %v571 = vpop.f32.mrb[0].mxu0
        %v572 = vadd.f32 0.0, %v571
        %v573 = vpop.f32.mrb[0].mxu0
        %574 = vmatprep.mubr.f32.mxu0 %v321
        %575 = vmatmul.mubr.f32.gmra.mrb[0].mxu0 %v320
        %v576 = vpop.f32.mrb[0].mxu0
        %v577 = vadd.f32 0.0, %v576
        %v578 = vpop.f32.mrb[0].mxu0
        %579 = vmatprep.mubr.f32.mxu0 %v323
        %580 = vmatmul.mubr.f32.gmra.mrb[0].mxu0 %v322
        %v581 = vpop.f32.mrb[0].mxu0
        %v582 = vadd.f32 0.0, %v581
        %v583 = vpop.f32.mrb[0].mxu0
        %584 = vmatprep.mubr.f32.mxu0 %v325
        %585 = vmatmul.mubr.f32.gmra.mrb[0].mxu0 %v324
        %v586 = vpop.f32.mrb[0].mxu0
        %v587 = vadd.f32 0.0, %v586
        %v588 = vpop.f32.mrb[0].mxu0
        %589 = vmatprep.mubr.f32.mxu0 %v327
        %590 = vmatmul.mubr.f32.gmra.mrb[0].mxu0 %v326
        %v591 = vpop.f32.mrb[0].mxu0
        %v592 = vadd.f32 0.0, %v591
        %v593 = vpop.f32.mrb[0].mxu0
        %594 = vmatprep.mubr.f32.mxu0 %v329
        %595 = vmatmul.mubr.f32.gmra.mrb[0].mxu0 %v328
        %v596 = vpop.f32.mrb[0].mxu0
        %v597 = vadd.f32 0.0, %v596
        %v598 = vpop.f32.mrb[0].mxu0
        %599 = vmatprep.mubr.f32.mxu0 %v331
        %600 = vmatmul.mubr.f32.gmra.mrb[0].mxu0 %v330
        %v601 = vpop.f32.mrb[0].mxu0
        %v602 = vadd.f32 0.0, %v601
        %v603 = vpop.f32.mrb[0].mxu0
        %604 = vmatprep.mubr.f32.mxu0 %v333
        %605 = vmatmul.mubr.f32.gmra.mrb[0].mxu0 %v332
        %v606 = vpop.f32.mrb[0].mxu0
        %v607 = vadd.f32 0.0, %v606
        %v608 = vpop.f32.mrb[0].mxu0
        %609 = vmatprep.mubr.f32.mxu0 %v335
        %610 = vmatmul.mubr.f32.gmra.mrb[0].mxu0 %v334
        %v611 = vpop.f32.mrb[0].mxu0
        %v612 = vadd.f32 0.0, %v611
        %v613 = vpop.f32.mrb[0].mxu0
        %614 = vmatprep.mubr.f32.mxu0 %v337
        %615 = vmatmul.mubr.f32.gmra.mrb[0].mxu0 %v336
        %v616 = vpop.f32.mrb[0].mxu0
        %v617 = vadd.f32 0.0, %v616
        %v618 = vpop.f32.mrb[0].mxu0
        %619 = vmatprep.mubr.f32.mxu0 %v339
        %620 = vmatmul.mubr.f32.gmra.mrb[0].mxu0 %v338
        %v621 = vpop.f32.mrb[0].mxu0
        %v622 = vadd.f32 0.0, %v621
        %v623 = vpop.f32.mrb[0].mxu0
        %624 = vmatprep.mubr.f32.mxu0 %v341
        %625 = vmatmul.mubr.f32.gmra.mrb[0].mxu0 %v340
        %v626 = vpop.f32.mrb[0].mxu0
        %v627 = vadd.f32 0.0, %v626
        %v628 = vpop.f32.mrb[0].mxu0
        %629 = vmatprep.mubr.f32.mxu0 %v343
        %630 = vmatmul.mubr.f32.gmra.mrb[0].mxu0 %v342
        %v631 = vpop.f32.mrb[0].mxu0
        %v632 = vadd.f32 0.0, %v631
        %v633 = vpop.f32.mrb[0].mxu0
        %634 = vmatprep.mubr.f32.mxu0 %v345
        %635 = vmatmul.mubr.f32.gmra.mrb[0].mxu0 %v344
        %v636 = vpop.f32.mrb[0].mxu0
        %v637 = vadd.f32 0.0, %v636
        %v638 = vpop.f32.mrb[0].mxu0
        %639 = vmatprep.mubr.f32.mxu0 %v347
        %640 = vmatmul.mubr.f32.gmra.mrb[0].mxu0 %v346
        %v641 = vpop.f32.mrb[0].mxu0
        %v642 = vadd.f32 0.0, %v641
        %v643 = vpop.f32.mrb[0].mxu0
        %644 = vmatprep.mubr.f32.mxu0 %v349
        %645 = vmatmul.mubr.f32.gmra.mrb[0].mxu0 %v348
        %v646 = vpop.f32.mrb[0].mxu0
        %v647 = vadd.f32 0.0, %v646
        %v648 = vpop.f32.mrb[0].mxu0
        %649 = vmatprep.mubr.f32.mxu0 %v351
        %650 = vmatmul.mubr.f32.gmra.mrb[0].mxu0 %v350
        %v651 = vpop.f32.mrb[0].mxu0
        %v652 = vadd.f32 0.0, %v651
        %v653 = vpop.f32.mrb[0].mxu0
        %654 = vmatprep.mubr.f32.mxu0 %v353
        %655 = vmatmul.mubr.f32.gmra.mrb[0].mxu0 %v352
        %v656 = vpop.f32.mrb[0].mxu0
        %v657 = vadd.f32 0.0, %v656
        %v658 = vpop.f32.mrb[0].mxu0
        %659 = vmatprep.mubr.f32.mxu0 %v355
        %660 = vmatmul.mubr.f32.gmra.mrb[0].mxu0 %v354
        %v661 = vpop.f32.mrb[0].mxu0
        %v662 = vadd.f32 0.0, %v661
        %v663 = vpop.f32.mrb[0].mxu0
        %664 = vmatprep.mubr.f32.mxu0 %v357
        %665 = vmatmul.mubr.f32.gmra.mrb[0].mxu0 %v356
        %v666 = vpop.f32.mrb[0].mxu0
        %v667 = vadd.f32 0.0, %v666
        %v668 = vpop.f32.mrb[0].mxu0
        %669 = vmatprep.mubr.f32.mxu0 %v359
        %670 = vmatmul.mubr.f32.gmra.mrb[0].mxu0 %v358
        %v671 = vpop.f32.mrb[0].mxu0
        %v672 = vadd.f32 0.0, %v671
        %v673 = vpop.f32.mrb[0].mxu0
        %674 = vmatprep.mubr.f32.mxu0 %v361
        %675 = vmatmul.mubr.f32.gmra.mrb[0].mxu0 %v360
        %v676 = vpop.f32.mrb[0].mxu0
        %v677 = vadd.f32 0.0, %v676
        %v678 = vpop.f32.mrb[0].mxu0
        %679 = vmatprep.mubr.f32.mxu0 %v363
        %680 = vmatmul.mubr.f32.gmra.mrb[0].mxu0 %v362
        %v681 = vpop.f32.mrb[0].mxu0
        %v682 = vadd.f32 0.0, %v681
        %v683 = vpop.f32.mrb[0].mxu0
        %684 = vmatprep.mubr.f32.mxu0 %v365
        %685 = vmatmul.mubr.f32.gmra.mrb[0].mxu0 %v364
        %v686 = vpop.f32.mrb[0].mxu0
        %v687 = vadd.f32 0.0, %v686
        %v688 = vpop.f32.mrb[0].mxu0
        %689 = vmatprep.mubr.f32.mxu0 %v367
        %690 = vmatmul.mubr.f32.gmra.mrb[0].mxu0 %v366
        %v691 = vpop.f32.mrb[0].mxu0
        %v692 = vadd.f32 0.0, %v691
        %v693 = vpop.f32.mrb[0].mxu0
        %694 = vmatprep.mubr.f32.mxu0 %v369
        %695 = vmatmul.mubr.f32.gmra.mrb[0].mxu0 %v368
        %v696 = vpop.f32.mrb[0].mxu0
        %v697 = vadd.f32 0.0, %v696
        %v698 = vpop.f32.mrb[0].mxu0
        %699 = vmatprep.mubr.f32.mxu0 %v371
        %700 = vmatmul.mubr.f32.gmra.mrb[0].mxu0 %v370
        %v701 = vpop.f32.mrb[0].mxu0
        %v702 = vadd.f32 0.0, %v701
        %v703 = vpop.f32.mrb[0].mxu0
        %704 = vmatprep.mubr.f32.mxu0 %v373
        %705 = vmatmul.mubr.f32.gmra.mrb[0].mxu0 %v372
        %v706 = vpop.f32.mrb[0].mxu0
        %v707 = vadd.f32 0.0, %v706
        %v708 = vpop.f32.mrb[0].mxu0
        %709 = vmatprep.mubr.f32.mxu0 %v375
        %710 = vmatmul.mubr.f32.gmra.mrb[0].mxu0 %v374
        %v711 = vpop.f32.mrb[0].mxu0
        %v712 = vadd.f32 0.0, %v711
        %v713 = vpop.f32.mrb[0].mxu0
        %714 = vmatprep.mubr.f32.mxu0 %v377
        %715 = vmatmul.mubr.f32.gmra.mrb[0].mxu0 %v376
        %v716 = vpop.f32.mrb[0].mxu0
        %v717 = vadd.f32 0.0, %v716
        %v718 = vpop.f32.mrb[0].mxu0
        %719 = vmatprep.mubr.f32.mxu0 %v379
        %720 = vmatmul.mubr.f32.gmra.mrb[0].mxu0 %v378
        %v721 = vpop.f32.mrb[0].mxu0
        %v722 = vadd.f32 0.0, %v721
        %v723 = vpop.f32.mrb[0].mxu0
        %724 = vmatprep.mubr.f32.mxu0 %v381
        %725 = vmatmul.mubr.f32.gmra.mrb[0].mxu0 %v380
        %v726 = vpop.f32.mrb[0].mxu0
        %v727 = vadd.f32 0.0, %v726
        %v728 = vpop.f32.mrb[0].mxu0
        %729 = vmatprep.mubr.f32.mxu0 %v383
        %730 = vmatmul.mubr.f32.gmra.mrb[0].mxu0 %v382
        %v731 = vpop.f32.mrb[0].mxu0
        %v732 = vadd.f32 0.0, %v731
        %v733 = vpop.f32.mrb[0].mxu0
        %734 = vmatprep.mubr.f32.mxu0 %v385
        %735 = vmatmul.mubr.f32.gmra.mrb[0].mxu0 %v384
        %v736 = vpop.f32.mrb[0].mxu0
        %v737 = vadd.f32 0.0, %v736
        %v738 = vpop.f32.mrb[0].mxu0
        %739 = vmatprep.mubr.f32.mxu0 %v387
        %740 = vmatmul.mubr.f32.gmra.mrb[0].mxu0 %v386
        %v741 = vpop.f32.mrb[0].mxu0
        %v742 = vadd.f32 0.0, %v741
        %v743 = vpop.f32.mrb[0].mxu0
        %744 = vmatprep.mubr.f32.mxu0 %v389
        %745 = vmatmul.mubr.f32.gmra.mrb[0].mxu0 %v388
        %v746 = vpop.f32.mrb[0].mxu0
        %v747 = vadd.f32 0.0, %v746
        %v748 = vpop.f32.mrb[0].mxu0
        %749 = vmatprep.mubr.f32.mxu0 %v391
        %750 = vmatmul.mubr.f32.gmra.mrb[0].mxu0 %v390
        %v751 = vpop.f32.mrb[0].mxu0
        %v752 = vadd.f32 0.0, %v751
        %v753 = vpop.f32.mrb[0].mxu0
        %754 = vmatprep.mubr.f32.mxu0 %v393
        %755 = vmatmul.mubr.f32.gmra.mrb[0].mxu0 %v392
        %v756 = vpop.f32.mrb[0].mxu0
        %v757 = vadd.f32 0.0, %v756
        %v758 = vpop.f32.mrb[0].mxu0
        %759 = vmatprep.mubr.f32.mxu0 %v395
        %760 = vmatmul.mubr.f32.gmra.mrb[0].mxu0 %v394
        %v761 = vpop.f32.mrb[0].mxu0
        %v762 = vadd.f32 0.0, %v761
        %v763 = vpop.f32.mrb[0].mxu0
        %764 = vmatprep.mubr.f32.mxu0 %v397
        %765 = vmatmul.mubr.f32.gmra.mrb[0].mxu0 %v396
        %v766 = vpop.f32.mrb[0].mxu0
        %v767 = vadd.f32 0.0, %v766
        %v768 = vpop.f32.mrb[0].mxu0
        %769 = vmatprep.mubr.f32.mxu0 %v399
        %770 = vmatmul.mubr.f32.gmra.mrb[0].mxu0 %v398
        %v771 = vpop.f32.mrb[0].mxu0
        %v772 = vadd.f32 0.0, %v771
        %v773 = vpop.f32.mrb[0].mxu0
        %774 = vmatprep.mubr.f32.mxu0 %v401
        %775 = vmatmul.mubr.f32.gmra.mrb[0].mxu0 %v400
        %v776 = vpop.f32.mrb[0].mxu0
        %v777 = vadd.f32 0.0, %v776
        %v778 = vpop.f32.mrb[0].mxu0
        %779 = vmatprep.mubr.f32.mxu0 %v403
        %780 = vmatmul.mubr.f32.gmra.mrb[0].mxu0 %v402
        %v781 = vpop.f32.mrb[0].mxu0
        %v782 = vadd.f32 0.0, %v781
        %v783 = vpop.f32.mrb[0].mxu0
        %784 = vmatprep.mubr.f32.mxu0 %v405
        %785 = vmatmul.mubr.f32.gmra.mrb[0].mxu0 %v404
        %v786 = vpop.f32.mrb[0].mxu0
        %v787 = vadd.f32 0.0, %v786
        %v788 = vpop.f32.mrb[0].mxu0
        %789 = vmatprep.mubr.f32.mxu0 %v407
        %790 = vmatmul.mubr.f32.gmra.mrb[0].mxu0 %v406
        %v791 = vpop.f32.mrb[0].mxu0
        %v792 = vadd.f32 0.0, %v791
        %v793 = vpop.f32.mrb[0].mxu0
        %794 = vmatprep.mubr.f32.mxu0 %v409
        %795 = vmatmul.mubr.f32.gmra.mrb[0].mxu0 %v408
        %v796 = vpop.f32.mrb[0].mxu0
        %v797 = vadd.f32 0.0, %v796
        %v798 = vpop.f32.mrb[0].mxu0
        %799 = vmatprep.mubr.f32.mxu0 %v411
        %800 = vmatmul.mubr.f32.gmra.mrb[0].mxu0 %v410
        %v801 = vpop.f32.mrb[0].mxu0
        %v802 = vadd.f32 0.0, %v801
        %v803 = vpop.f32.mrb[0].mxu0
        %804 = vmatprep.mubr.f32.mxu0 %v413
        %805 = vmatmul.mubr.f32.gmra.mrb[0].mxu0 %v412
        %v806 = vpop.f32.mrb[0].mxu0
        %v807 = vadd.f32 0.0, %v806
        %v808 = vpop.f32.mrb[0].mxu0
        %809 = vmatprep.mubr.f32.mxu0 %v415
        %810 = vmatmul.mubr.f32.gmra.mrb[0].mxu0 %v414
        %v811 = vpop.f32.mrb[0].mxu0
        %v812 = vadd.f32 0.0, %v811
        %v813 = vpop.f32.mrb[0].mxu0
        %814 = vmatprep.mubr.f32.mxu0 %v417
        %815 = vmatmul.mubr.f32.gmra.mrb[0].mxu0 %v416
        %v816 = vpop.f32.mrb[0].mxu0
        %v817 = vadd.f32 0.0, %v816
        %v818 = vpop.f32.mrb[0].mxu0
        %819 = vmatprep.mubr.f32.mxu0 %v419
        %820 = vmatmul.mubr.f32.gmra.mrb[0].mxu0 %v418
        %v821 = vpop.f32.mrb[0].mxu0
        %v822 = vadd.f32 0.0, %v821
        %v823 = vpop.f32.mrb[0].mxu0
        %824 = vmatprep.mubr.f32.mxu0 %v421
        %825 = vmatmul.mubr.f32.gmra.mrb[0].mxu0 %v420
        %v826 = vpop.f32.mrb[0].mxu0
        %v827 = vadd.f32 0.0, %v826
        %v828 = vpop.f32.mrb[0].mxu0
        %829 = vmatprep.mubr.f32.mxu0 %v423
        %830 = vmatmul.mubr.f32.gmra.mrb[0].mxu0 %v422
        %v831 = vpop.f32.mrb[0].mxu0
        %v832 = vadd.f32 0.0, %v831
        %v833 = vpop.f32.mrb[0].mxu0
        %834 = vmatprep.mubr.f32.mxu0 %v425
        %835 = vmatmul.mubr.f32.gmra.mrb[0].mxu0 %v424
        %v836 = vpop.f32.mrb[0].mxu0
        %v837 = vadd.f32 0.0, %v836
        %v838 = vpop.f32.mrb[0].mxu0
        %839 = vmatprep.mubr.f32.mxu0 %v427
        %840 = vmatmul.mubr.f32.gmra.mrb[0].mxu0 %v426
        %v841 = vpop.f32.mrb[0].mxu0
        %v842 = vadd.f32 0.0, %v841
        %v843 = vpop.f32.mrb[0].mxu0
        %844 = vdwg.mxu0
        %p845 = scmp.eq.s32.totalorder %s25, 0
        // Predicated region
        $region37: #{_conv2d_impl.1} parent=35 // pred_check
          %p846 = pneg %p845
        $region38: #{_conv2d_impl.1} parent=35 // pred_check_branch
          %848 = sbr.rel (%p846) target = $region40
        $region39: #{_conv2d_impl.1} parent=35 // pred_region
          %849 = vst [vmem:[%s271] sm:$0xff] %v527
          %850 = vst [vmem:[%s271 + $0x8] sm:$0xff] %v532
          %851 = vst [vmem:[%s271 + $0x10] sm:$0xff] %v537
          %852 = vst [vmem:[%s271 + $0x18] sm:$0xff] %v542
          %853 = vst [vmem:[%s271 + $0x20] sm:$0xff] %v547
          %854 = vst [vmem:[%s271 + $0x28] sm:$0xff] %v552
          %855 = vst [vmem:[%s271 + $0x30] sm:$0xff] %v557
          %856 = vst [vmem:[%s271 + $0x38] sm:$0xff] %v562
          %857 = vst [vmem:[%s271 + $0x40] sm:$0xff] %v567
          %858 = vst [vmem:[%s271 + $0x48] sm:$0xff] %v572
          %859 = vst [vmem:[%s271 + $0x50] sm:$0xff] %v577
          %860 = vst [vmem:[%s271 + $0x58] sm:$0xff] %v582
          %861 = vst [vmem:[%s271 + $0x60] sm:$0xff] %v587
          %862 = vst [vmem:[%s271 + $0x68] sm:$0xff] %v592
          %863 = vst [vmem:[%s271 + $0x70] sm:$0xff] %v597
          %864 = vst [vmem:[%s271 + $0x78] sm:$0xff] %v602
          %865 = vst [vmem:[%s271 + $0x80] sm:$0xff] %v607
          %866 = vst [vmem:[%s271 + $0x88] sm:$0xff] %v612
          %867 = vst [vmem:[%s271 + $0x90] sm:$0xff] %v617
          %868 = vst [vmem:[%s271 + $0x98] sm:$0xff] %v622
          %869 = vst [vmem:[%s271 + $0xa0] sm:$0xff] %v627
          %870 = vst [vmem:[%s271 + $0xa8] sm:$0xff] %v632
          %871 = vst [vmem:[%s271 + $0xb0] sm:$0xff] %v637
          %872 = vst [vmem:[%s271 + $0xb8] sm:$0xff] %v642
          %873 = vst [vmem:[%s271 + $0xc0] sm:$0xff] %v647
          %874 = vst [vmem:[%s271 + $0xc8] sm:$0xff] %v652
          %875 = vst [vmem:[%s271 + $0xd0] sm:$0xff] %v657
          %876 = vst [vmem:[%s271 + $0xd8] sm:$0xff] %v662
          %877 = vst [vmem:[%s271 + $0xe0] sm:$0xff] %v667
          %878 = vst [vmem:[%s271 + $0xe8] sm:$0xff] %v672
          %879 = vst [vmem:[%s271 + $0xf0] sm:$0xff] %v677
          %880 = vst [vmem:[%s271 + $0xf8] sm:$0xff] %v682
          %881 = vst [vmem:[%s271 + $0x100] sm:$0xff] %v687
          %882 = vst [vmem:[%s271 + $0x108] sm:$0xff] %v692
          %883 = vst [vmem:[%s271 + $0x110] sm:$0xff] %v697
          %884 = vst [vmem:[%s271 + $0x118] sm:$0xff] %v702
          %885 = vst [vmem:[%s271 + $0x120] sm:$0xff] %v707
          %886 = vst [vmem:[%s271 + $0x128] sm:$0xff] %v712
          %887 = vst [vmem:[%s271 + $0x130] sm:$0xff] %v717
          %888 = vst [vmem:[%s271 + $0x138] sm:$0xff] %v722
          %889 = vst [vmem:[%s271 + $0x140] sm:$0xff] %v727
          %890 = vst [vmem:[%s271 + $0x148] sm:$0xff] %v732
          %891 = vst [vmem:[%s271 + $0x150] sm:$0xff] %v737
          %892 = vst [vmem:[%s271 + $0x158] sm:$0xff] %v742
          %893 = vst [vmem:[%s271 + $0x160] sm:$0xff] %v747
          %894 = vst [vmem:[%s271 + $0x168] sm:$0xff] %v752
          %895 = vst [vmem:[%s271 + $0x170] sm:$0xff] %v757
          %896 = vst [vmem:[%s271 + $0x178] sm:$0xff] %v762
          %897 = vst [vmem:[%s271 + $0x180] sm:$0xff] %v767
          %898 = vst [vmem:[%s271 + $0x188] sm:$0xff] %v772
          %899 = vst [vmem:[%s271 + $0x190] sm:$0xff] %v777
          %900 = vst [vmem:[%s271 + $0x198] sm:$0xff] %v782
          %901 = vst [vmem:[%s271 + $0x1a0] sm:$0xff] %v787
          %902 = vst [vmem:[%s271 + $0x1a8] sm:$0xff] %v792
          %903 = vst [vmem:[%s271 + $0x1b0] sm:$0xff] %v797
          %904 = vst [vmem:[%s271 + $0x1b8] sm:$0xff] %v802
          %905 = vst [vmem:[%s271 + $0x1c0] sm:$0xff] %v807
          %906 = vst [vmem:[%s271 + $0x1c8] sm:$0xff] %v812
          %907 = vst [vmem:[%s271 + $0x1d0] sm:$0xff] %v817
          %908 = vst [vmem:[%s271 + $0x1d8] sm:$0xff] %v822
          %909 = vst [vmem:[%s271 + $0x1e0] sm:$0xff] %v827
          %910 = vst [vmem:[%s271 + $0x1e8] sm:$0xff] %v832
          %911 = vst [vmem:[%s271 + $0x1f0] sm:$0xff] %v837
          %912 = vst [vmem:[%s271 + $0x1f8] sm:$0xff] %v842
        $region40: #{_conv2d_impl.1} parent=35 // pred_fallthru
          _
        %p913 = scmp.ne.s32.totalorder %s25, 0
        // Predicated region
        $region41: #{_conv2d_impl.1} parent=35 // pred_check
          %p914 = pneg %p913
        $region42: #{_conv2d_impl.1} parent=35 // pred_check_branch
          %916 = sbr.rel (%p914) target = $region44
        $region43: #{_conv2d_impl.1} parent=35 // pred_region
          %v917 = vld [vmem:[%s271] sm:$0xff]
          %v918 = vld [vmem:[%s271 + $0x8] sm:$0xff]
          %v919 = vld [vmem:[%s271 + $0x10] sm:$0xff]
          %v920 = vld [vmem:[%s271 + $0x18] sm:$0xff]
          %v921 = vld [vmem:[%s271 + $0x20] sm:$0xff]
          %v922 = vld [vmem:[%s271 + $0x28] sm:$0xff]
          %v923 = vld [vmem:[%s271 + $0x30] sm:$0xff]
          %v924 = vld [vmem:[%s271 + $0x38] sm:$0xff]
          %v925 = vld [vmem:[%s271 + $0x40] sm:$0xff]
          %v926 = vld [vmem:[%s271 + $0x48] sm:$0xff]
          %v927 = vld [vmem:[%s271 + $0x50] sm:$0xff]
          %v928 = vld [vmem:[%s271 + $0x58] sm:$0xff]
          %v929 = vld [vmem:[%s271 + $0x60] sm:$0xff]
          %v930 = vld [vmem:[%s271 + $0x68] sm:$0xff]
          %v931 = vld [vmem:[%s271 + $0x70] sm:$0xff]
          %v932 = vld [vmem:[%s271 + $0x78] sm:$0xff]
          %v933 = vld [vmem:[%s271 + $0x80] sm:$0xff]
          %v934 = vld [vmem:[%s271 + $0x88] sm:$0xff]
          %v935 = vld [vmem:[%s271 + $0x90] sm:$0xff]
          %v936 = vld [vmem:[%s271 + $0x98] sm:$0xff]
          %v937 = vld [vmem:[%s271 + $0xa0] sm:$0xff]
          %v938 = vld [vmem:[%s271 + $0xa8] sm:$0xff]
          %v939 = vld [vmem:[%s271 + $0xb0] sm:$0xff]
          %v940 = vld [vmem:[%s271 + $0xb8] sm:$0xff]
          %v941 = vld [vmem:[%s271 + $0xc0] sm:$0xff]
          %v942 = vld [vmem:[%s271 + $0xc8] sm:$0xff]
          %v943 = vld [vmem:[%s271 + $0xd0] sm:$0xff]
          %v944 = vld [vmem:[%s271 + $0xd8] sm:$0xff]
          %v945 = vld [vmem:[%s271 + $0xe0] sm:$0xff]
          %v946 = vld [vmem:[%s271 + $0xe8] sm:$0xff]
          %v947 = vld [vmem:[%s271 + $0xf0] sm:$0xff]
          %v948 = vld [vmem:[%s271 + $0xf8] sm:$0xff]
          %v949 = vld [vmem:[%s271 + $0x100] sm:$0xff]
          %v950 = vld [vmem:[%s271 + $0x108] sm:$0xff]
          %v951 = vld [vmem:[%s271 + $0x110] sm:$0xff]
          %v952 = vld [vmem:[%s271 + $0x118] sm:$0xff]
          %v953 = vld [vmem:[%s271 + $0x120] sm:$0xff]
          %v954 = vld [vmem:[%s271 + $0x128] sm:$0xff]
          %v955 = vld [vmem:[%s271 + $0x130] sm:$0xff]
          %v956 = vld [vmem:[%s271 + $0x138] sm:$0xff]
          %v957 = vld [vmem:[%s271 + $0x140] sm:$0xff]
          %v958 = vld [vmem:[%s271 + $0x148] sm:$0xff]
          %v959 = vld [vmem:[%s271 + $0x150] sm:$0xff]
          %v960 = vld [vmem:[%s271 + $0x158] sm:$0xff]
          %v961 = vld [vmem:[%s271 + $0x160] sm:$0xff]
          %v962 = vld [vmem:[%s271 + $0x168] sm:$0xff]
          %v963 = vld [vmem:[%s271 + $0x170] sm:$0xff]
          %v964 = vld [vmem:[%s271 + $0x178] sm:$0xff]
          %v965 = vld [vmem:[%s271 + $0x180] sm:$0xff]
          %v966 = vld [vmem:[%s271 + $0x188] sm:$0xff]
          %v967 = vld [vmem:[%s271 + $0x190] sm:$0xff]
          %v968 = vld [vmem:[%s271 + $0x198] sm:$0xff]
          %v969 = vld [vmem:[%s271 + $0x1a0] sm:$0xff]
          %v970 = vld [vmem:[%s271 + $0x1a8] sm:$0xff]
          %v971 = vld [vmem:[%s271 + $0x1b0] sm:$0xff]
          %v972 = vld [vmem:[%s271 + $0x1b8] sm:$0xff]
          %v973 = vld [vmem:[%s271 + $0x1c0] sm:$0xff]
          %v974 = vld [vmem:[%s271 + $0x1c8] sm:$0xff]
          %v975 = vld [vmem:[%s271 + $0x1d0] sm:$0xff]
          %v976 = vld [vmem:[%s271 + $0x1d8] sm:$0xff]
          %v977 = vld [vmem:[%s271 + $0x1e0] sm:$0xff]
          %v978 = vld [vmem:[%s271 + $0x1e8] sm:$0xff]
          %v979 = vld [vmem:[%s271 + $0x1f0] sm:$0xff]
          %v980 = vld [vmem:[%s271 + $0x1f8] sm:$0xff]
          %v981 = vadd.f32 %v917, %v527
          %v982 = vadd.f32 %v918, %v532
          %v983 = vadd.f32 %v919, %v537
          %v984 = vadd.f32 %v920, %v542
          %v985 = vadd.f32 %v921, %v547
          %v986 = vadd.f32 %v922, %v552
          %v987 = vadd.f32 %v923, %v557
          %v988 = vadd.f32 %v924, %v562
          %v989 = vadd.f32 %v925, %v567
          %v990 = vadd.f32 %v926, %v572
          %v991 = vadd.f32 %v927, %v577
          %v992 = vadd.f32 %v928, %v582
          %v993 = vadd.f32 %v929, %v587
          %v994 = vadd.f32 %v930, %v592
          %v995 = vadd.f32 %v931, %v597
          %v996 = vadd.f32 %v932, %v602
          %v997 = vadd.f32 %v933, %v607
          %v998 = vadd.f32 %v934, %v612
          %v999 = vadd.f32 %v935, %v617
          %v1000 = vadd.f32 %v936, %v622
          %v1001 = vadd.f32 %v937, %v627
          %v1002 = vadd.f32 %v938, %v632
          %v1003 = vadd.f32 %v939, %v637
          %v1004 = vadd.f32 %v940, %v642
          %v1005 = vadd.f32 %v941, %v647
          %v1006 = vadd.f32 %v942, %v652
          %v1007 = vadd.f32 %v943, %v657
          %v1008 = vadd.f32 %v944, %v662
          %v1009 = vadd.f32 %v945, %v667
          %v1010 = vadd.f32 %v946, %v672
          %v1011 = vadd.f32 %v947, %v677
          %v1012 = vadd.f32 %v948, %v682
          %v1013 = vadd.f32 %v949, %v687
          %v1014 = vadd.f32 %v950, %v692
          %v1015 = vadd.f32 %v951, %v697
          %v1016 = vadd.f32 %v952, %v702
          %v1017 = vadd.f32 %v953, %v707
          %v1018 = vadd.f32 %v954, %v712
          %v1019 = vadd.f32 %v955, %v717
          %v1020 = vadd.f32 %v956, %v722
          %v1021 = vadd.f32 %v957, %v727
          %v1022 = vadd.f32 %v958, %v732
          %v1023 = vadd.f32 %v959, %v737
          %v1024 = vadd.f32 %v960, %v742
          %v1025 = vadd.f32 %v961, %v747
          %v1026 = vadd.f32 %v962, %v752
          %v1027 = vadd.f32 %v963, %v757
          %v1028 = vadd.f32 %v964, %v762
          %v1029 = vadd.f32 %v965, %v767
          %v1030 = vadd.f32 %v966, %v772
          %v1031 = vadd.f32 %v967, %v777
          %v1032 = vadd.f32 %v968, %v782
          %v1033 = vadd.f32 %v969, %v787
          %v1034 = vadd.f32 %v970, %v792
          %v1035 = vadd.f32 %v971, %v797
          %v1036 = vadd.f32 %v972, %v802
          %v1037 = vadd.f32 %v973, %v807
          %v1038 = vadd.f32 %v974, %v812
          %v1039 = vadd.f32 %v975, %v817
          %v1040 = vadd.f32 %v976, %v822
          %v1041 = vadd.f32 %v977, %v827
          %v1042 = vadd.f32 %v978, %v832
          %v1043 = vadd.f32 %v979, %v837
          %v1044 = vadd.f32 %v980, %v842
          %1045 = vst [vmem:[%s271] sm:$0xff] %v981
          %1046 = vst [vmem:[%s271 + $0x8] sm:$0xff] %v982
          %1047 = vst [vmem:[%s271 + $0x10] sm:$0xff] %v983
          %1048 = vst [vmem:[%s271 + $0x18] sm:$0xff] %v984
          %1049 = vst [vmem:[%s271 + $0x20] sm:$0xff] %v985
          %1050 = vst [vmem:[%s271 + $0x28] sm:$0xff] %v986
          %1051 = vst [vmem:[%s271 + $0x30] sm:$0xff] %v987
          %1052 = vst [vmem:[%s271 + $0x38] sm:$0xff] %v988
          %1053 = vst [vmem:[%s271 + $0x40] sm:$0xff] %v989
          %1054 = vst [vmem:[%s271 + $0x48] sm:$0xff] %v990
          %1055 = vst [vmem:[%s271 + $0x50] sm:$0xff] %v991
          %1056 = vst [vmem:[%s271 + $0x58] sm:$0xff] %v992
          %1057 = vst [vmem:[%s271 + $0x60] sm:$0xff] %v993
          %1058 = vst [vmem:[%s271 + $0x68] sm:$0xff] %v994
          %1059 = vst [vmem:[%s271 + $0x70] sm:$0xff] %v995
          %1060 = vst [vmem:[%s271 + $0x78] sm:$0xff] %v996
          %1061 = vst [vmem:[%s271 + $0x80] sm:$0xff] %v997
          %1062 = vst [vmem:[%s271 + $0x88] sm:$0xff] %v998
          %1063 = vst [vmem:[%s271 + $0x90] sm:$0xff] %v999
          %1064 = vst [vmem:[%s271 + $0x98] sm:$0xff] %v1000
          %1065 = vst [vmem:[%s271 + $0xa0] sm:$0xff] %v1001
          %1066 = vst [vmem:[%s271 + $0xa8] sm:$0xff] %v1002
          %1067 = vst [vmem:[%s271 + $0xb0] sm:$0xff] %v1003
          %1068 = vst [vmem:[%s271 + $0xb8] sm:$0xff] %v1004
          %1069 = vst [vmem:[%s271 + $0xc0] sm:$0xff] %v1005
          %1070 = vst [vmem:[%s271 + $0xc8] sm:$0xff] %v1006
          %1071 = vst [vmem:[%s271 + $0xd0] sm:$0xff] %v1007
          %1072 = vst [vmem:[%s271 + $0xd8] sm:$0xff] %v1008
          %1073 = vst [vmem:[%s271 + $0xe0] sm:$0xff] %v1009
          %1074 = vst [vmem:[%s271 + $0xe8] sm:$0xff] %v1010
          %1075 = vst [vmem:[%s271 + $0xf0] sm:$0xff] %v1011
          %1076 = vst [vmem:[%s271 + $0xf8] sm:$0xff] %v1012
          %1077 = vst [vmem:[%s271 + $0x100] sm:$0xff] %v1013
          %1078 = vst [vmem:[%s271 + $0x108] sm:$0xff] %v1014
          %1079 = vst [vmem:[%s271 + $0x110] sm:$0xff] %v1015
          %1080 = vst [vmem:[%s271 + $0x118] sm:$0xff] %v1016
          %1081 = vst [vmem:[%s271 + $0x120] sm:$0xff] %v1017
          %1082 = vst [vmem:[%s271 + $0x128] sm:$0xff] %v1018
          %1083 = vst [vmem:[%s271 + $0x130] sm:$0xff] %v1019
          %1084 = vst [vmem:[%s271 + $0x138] sm:$0xff] %v1020
          %1085 = vst [vmem:[%s271 + $0x140] sm:$0xff] %v1021
          %1086 = vst [vmem:[%s271 + $0x148] sm:$0xff] %v1022
          %1087 = vst [vmem:[%s271 + $0x150] sm:$0xff] %v1023
          %1088 = vst [vmem:[%s271 + $0x158] sm:$0xff] %v1024
          %1089 = vst [vmem:[%s271 + $0x160] sm:$0xff] %v1025
          %1090 = vst [vmem:[%s271 + $0x168] sm:$0xff] %v1026
          %1091 = vst [vmem:[%s271 + $0x170] sm:$0xff] %v1027
          %1092 = vst [vmem:[%s271 + $0x178] sm:$0xff] %v1028
          %1093 = vst [vmem:[%s271 + $0x180] sm:$0xff] %v1029
          %1094 = vst [vmem:[%s271 + $0x188] sm:$0xff] %v1030
          %1095 = vst [vmem:[%s271 + $0x190] sm:$0xff] %v1031
          %1096 = vst [vmem:[%s271 + $0x198] sm:$0xff] %v1032
          %1097 = vst [vmem:[%s271 + $0x1a0] sm:$0xff] %v1033
          %1098 = vst [vmem:[%s271 + $0x1a8] sm:$0xff] %v1034
          %1099 = vst [vmem:[%s271 + $0x1b0] sm:$0xff] %v1035
          %1100 = vst [vmem:[%s271 + $0x1b8] sm:$0xff] %v1036
          %1101 = vst [vmem:[%s271 + $0x1c0] sm:$0xff] %v1037
          %1102 = vst [vmem:[%s271 + $0x1c8] sm:$0xff] %v1038
          %1103 = vst [vmem:[%s271 + $0x1d0] sm:$0xff] %v1039
          %1104 = vst [vmem:[%s271 + $0x1d8] sm:$0xff] %v1040
          %1105 = vst [vmem:[%s271 + $0x1e0] sm:$0xff] %v1041
          %1106 = vst [vmem:[%s271 + $0x1e8] sm:$0xff] %v1042
          %1107 = vst [vmem:[%s271 + $0x1f0] sm:$0xff] %v1043
          %1108 = vst [vmem:[%s271 + $0x1f8] sm:$0xff] %v1044
        $region44: #{_conv2d_impl.1} parent=35 // pred_fallthru
          _
        // Predicated region
        $region45: #{_conv2d_impl.1} parent=35 // pred_check
          %p1109 = pneg %p845
        $region46: #{_conv2d_impl.1} parent=35 // pred_check_branch
          %1111 = sbr.rel (%p1109) target = $region48
        $region47: #{_conv2d_impl.1} parent=35 // pred_region
          %v1112 = vld [vmem:[%s271] sm:$0xff]
          %v1113 = vld [vmem:[%s271 + $0x8] sm:$0xff]
          %v1114 = vld [vmem:[%s271 + $0x10] sm:$0xff]
          %v1115 = vld [vmem:[%s271 + $0x18] sm:$0xff]
          %v1116 = vld [vmem:[%s271 + $0x20] sm:$0xff]
          %v1117 = vld [vmem:[%s271 + $0x28] sm:$0xff]
          %v1118 = vld [vmem:[%s271 + $0x30] sm:$0xff]
          %v1119 = vld [vmem:[%s271 + $0x38] sm:$0xff]
          %v1120 = vld [vmem:[%s271 + $0x40] sm:$0xff]
          %v1121 = vld [vmem:[%s271 + $0x48] sm:$0xff]
          %v1122 = vld [vmem:[%s271 + $0x50] sm:$0xff]
          %v1123 = vld [vmem:[%s271 + $0x58] sm:$0xff]
          %v1124 = vld [vmem:[%s271 + $0x60] sm:$0xff]
          %v1125 = vld [vmem:[%s271 + $0x68] sm:$0xff]
          %v1126 = vld [vmem:[%s271 + $0x70] sm:$0xff]
          %v1127 = vld [vmem:[%s271 + $0x78] sm:$0xff]
          %v1128 = vld [vmem:[%s271 + $0x80] sm:$0xff]
          %v1129 = vld [vmem:[%s271 + $0x88] sm:$0xff]
          %v1130 = vld [vmem:[%s271 + $0x90] sm:$0xff]
          %v1131 = vld [vmem:[%s271 + $0x98] sm:$0xff]
          %v1132 = vld [vmem:[%s271 + $0xa0] sm:$0xff]
          %v1133 = vld [vmem:[%s271 + $0xa8] sm:$0xff]
          %v1134 = vld [vmem:[%s271 + $0xb0] sm:$0xff]
          %v1135 = vld [vmem:[%s271 + $0xb8] sm:$0xff]
          %v1136 = vld [vmem:[%s271 + $0xc0] sm:$0xff]
          %v1137 = vld [vmem:[%s271 + $0xc8] sm:$0xff]
          %v1138 = vld [vmem:[%s271 + $0xd0] sm:$0xff]
          %v1139 = vld [vmem:[%s271 + $0xd8] sm:$0xff]
          %v1140 = vld [vmem:[%s271 + $0xe0] sm:$0xff]
          %v1141 = vld [vmem:[%s271 + $0xe8] sm:$0xff]
          %v1142 = vld [vmem:[%s271 + $0xf0] sm:$0xff]
          %v1143 = vld [vmem:[%s271 + $0xf8] sm:$0xff]
          %v1144 = vld [vmem:[%s271 + $0x100] sm:$0xff]
          %v1145 = vld [vmem:[%s271 + $0x108] sm:$0xff]
          %v1146 = vld [vmem:[%s271 + $0x110] sm:$0xff]
          %v1147 = vld [vmem:[%s271 + $0x118] sm:$0xff]
          %v1148 = vld [vmem:[%s271 + $0x120] sm:$0xff]
          %v1149 = vld [vmem:[%s271 + $0x128] sm:$0xff]
          %v1150 = vld [vmem:[%s271 + $0x130] sm:$0xff]
          %v1151 = vld [vmem:[%s271 + $0x138] sm:$0xff]
          %v1152 = vld [vmem:[%s271 + $0x140] sm:$0xff]
          %v1153 = vld [vmem:[%s271 + $0x148] sm:$0xff]
          %v1154 = vld [vmem:[%s271 + $0x150] sm:$0xff]
          %v1155 = vld [vmem:[%s271 + $0x158] sm:$0xff]
          %v1156 = vld [vmem:[%s271 + $0x160] sm:$0xff]
          %v1157 = vld [vmem:[%s271 + $0x168] sm:$0xff]
          %v1158 = vld [vmem:[%s271 + $0x170] sm:$0xff]
          %v1159 = vld [vmem:[%s271 + $0x178] sm:$0xff]
          %v1160 = vld [vmem:[%s271 + $0x180] sm:$0xff]
          %v1161 = vld [vmem:[%s271 + $0x188] sm:$0xff]
          %v1162 = vld [vmem:[%s271 + $0x190] sm:$0xff]
          %v1163 = vld [vmem:[%s271 + $0x198] sm:$0xff]
          %v1164 = vld [vmem:[%s271 + $0x1a0] sm:$0xff]
          %v1165 = vld [vmem:[%s271 + $0x1a8] sm:$0xff]
          %v1166 = vld [vmem:[%s271 + $0x1b0] sm:$0xff]
          %v1167 = vld [vmem:[%s271 + $0x1b8] sm:$0xff]
          %v1168 = vld [vmem:[%s271 + $0x1c0] sm:$0xff]
          %v1169 = vld [vmem:[%s271 + $0x1c8] sm:$0xff]
          %v1170 = vld [vmem:[%s271 + $0x1d0] sm:$0xff]
          %v1171 = vld [vmem:[%s271 + $0x1d8] sm:$0xff]
          %v1172 = vld [vmem:[%s271 + $0x1e0] sm:$0xff]
          %v1173 = vld [vmem:[%s271 + $0x1e8] sm:$0xff]
          %v1174 = vld [vmem:[%s271 + $0x1f0] sm:$0xff]
          %v1175 = vld [vmem:[%s271 + $0x1f8] sm:$0xff]
          %v1176 = vld [vmem:[%s295] sm:$0x1]
          %v1178 = vlaneseq
          %v1179 = vshrl.u32 %v1178, 7
          %v1180 = vsub.s32 0, %v1179
          %v1181 = vrot.slane %v1176, %v1180
          %v1183 = vmul.f32 %v1112, %v1181
          %v1184 = vmul.f32 %v1113, %v1181
          %v1185 = vmul.f32 %v1114, %v1181
          %v1186 = vmul.f32 %v1115, %v1181
          %v1187 = vmul.f32 %v1116, %v1181
          %v1188 = vmul.f32 %v1117, %v1181
          %v1189 = vmul.f32 %v1118, %v1181
          %v1190 = vmul.f32 %v1119, %v1181
          %v1191 = vmul.f32 %v1120, %v1181
          %v1192 = vmul.f32 %v1121, %v1181
          %v1193 = vmul.f32 %v1122, %v1181
          %v1194 = vmul.f32 %v1123, %v1181
          %v1195 = vmul.f32 %v1124, %v1181
          %v1196 = vmul.f32 %v1125, %v1181
          %v1197 = vmul.f32 %v1126, %v1181
          %v1198 = vmul.f32 %v1127, %v1181
          %v1199 = vmul.f32 %v1128, %v1181
          %v1200 = vmul.f32 %v1129, %v1181
          %v1201 = vmul.f32 %v1130, %v1181
          %v1202 = vmul.f32 %v1131, %v1181
          %v1203 = vmul.f32 %v1132, %v1181
          %v1204 = vmul.f32 %v1133, %v1181
          %v1205 = vmul.f32 %v1134, %v1181
          %v1206 = vmul.f32 %v1135, %v1181
          %v1207 = vmul.f32 %v1136, %v1181
          %v1208 = vmul.f32 %v1137, %v1181
          %v1209 = vmul.f32 %v1138, %v1181
          %v1210 = vmul.f32 %v1139, %v1181
          %v1211 = vmul.f32 %v1140, %v1181
          %v1212 = vmul.f32 %v1141, %v1181
          %v1213 = vmul.f32 %v1142, %v1181
          %v1214 = vmul.f32 %v1143, %v1181
          %v1215 = vmul.f32 %v1144, %v1181
          %v1216 = vmul.f32 %v1145, %v1181
          %v1217 = vmul.f32 %v1146, %v1181
          %v1218 = vmul.f32 %v1147, %v1181
          %v1219 = vmul.f32 %v1148, %v1181
          %v1220 = vmul.f32 %v1149, %v1181
          %v1221 = vmul.f32 %v1150, %v1181
          %v1222 = vmul.f32 %v1151, %v1181
          %v1223 = vmul.f32 %v1152, %v1181
          %v1224 = vmul.f32 %v1153, %v1181
          %v1225 = vmul.f32 %v1154, %v1181
          %v1226 = vmul.f32 %v1155, %v1181
          %v1227 = vmul.f32 %v1156, %v1181
          %v1228 = vmul.f32 %v1157, %v1181
          %v1229 = vmul.f32 %v1158, %v1181
          %v1230 = vmul.f32 %v1159, %v1181
          %v1231 = vmul.f32 %v1160, %v1181
          %v1232 = vmul.f32 %v1161, %v1181
          %v1233 = vmul.f32 %v1162, %v1181
          %v1234 = vmul.f32 %v1163, %v1181
          %v1235 = vmul.f32 %v1164, %v1181
          %v1236 = vmul.f32 %v1165, %v1181
          %v1237 = vmul.f32 %v1166, %v1181
          %v1238 = vmul.f32 %v1167, %v1181
          %v1239 = vmul.f32 %v1168, %v1181
          %v1240 = vmul.f32 %v1169, %v1181
          %v1241 = vmul.f32 %v1170, %v1181
          %v1242 = vmul.f32 %v1171, %v1181
          %v1243 = vmul.f32 %v1172, %v1181
          %v1244 = vmul.f32 %v1173, %v1181
          %v1245 = vmul.f32 %v1174, %v1181
          %v1246 = vmul.f32 %v1175, %v1181
          %v1247 = vld [vmem:[%s298] sm:$0x1]
          %v1249 = vlaneseq
          %v1250 = vshrl.u32 %v1249, 7
          %v1251 = vsub.s32 0, %v1250
          %v1252 = vrot.slane %v1247, %v1251
          %v1254 = vadd.f32 %v1183, %v1252
          %v1255 = vadd.f32 %v1184, %v1252
          %v1256 = vadd.f32 %v1185, %v1252
          %v1257 = vadd.f32 %v1186, %v1252
          %v1258 = vadd.f32 %v1187, %v1252
          %v1259 = vadd.f32 %v1188, %v1252
          %v1260 = vadd.f32 %v1189, %v1252
          %v1261 = vadd.f32 %v1190, %v1252
          %v1262 = vadd.f32 %v1191, %v1252
          %v1263 = vadd.f32 %v1192, %v1252
          %v1264 = vadd.f32 %v1193, %v1252
          %v1265 = vadd.f32 %v1194, %v1252
          %v1266 = vadd.f32 %v1195, %v1252
          %v1267 = vadd.f32 %v1196, %v1252
          %v1268 = vadd.f32 %v1197, %v1252
          %v1269 = vadd.f32 %v1198, %v1252
          %v1270 = vadd.f32 %v1199, %v1252
          %v1271 = vadd.f32 %v1200, %v1252
          %v1272 = vadd.f32 %v1201, %v1252
          %v1273 = vadd.f32 %v1202, %v1252
          %v1274 = vadd.f32 %v1203, %v1252
          %v1275 = vadd.f32 %v1204, %v1252
          %v1276 = vadd.f32 %v1205, %v1252
          %v1277 = vadd.f32 %v1206, %v1252
          %v1278 = vadd.f32 %v1207, %v1252
          %v1279 = vadd.f32 %v1208, %v1252
          %v1280 = vadd.f32 %v1209, %v1252
          %v1281 = vadd.f32 %v1210, %v1252
          %v1282 = vadd.f32 %v1211, %v1252
          %v1283 = vadd.f32 %v1212, %v1252
          %v1284 = vadd.f32 %v1213, %v1252
          %v1285 = vadd.f32 %v1214, %v1252
          %v1286 = vadd.f32 %v1215, %v1252
          %v1287 = vadd.f32 %v1216, %v1252
          %v1288 = vadd.f32 %v1217, %v1252
          %v1289 = vadd.f32 %v1218, %v1252
          %v1290 = vadd.f32 %v1219, %v1252
          %v1291 = vadd.f32 %v1220, %v1252
          %v1292 = vadd.f32 %v1221, %v1252
          %v1293 = vadd.f32 %v1222, %v1252
          %v1294 = vadd.f32 %v1223, %v1252
          %v1295 = vadd.f32 %v1224, %v1252
          %v1296 = vadd.f32 %v1225, %v1252
          %v1297 = vadd.f32 %v1226, %v1252
          %v1298 = vadd.f32 %v1227, %v1252
          %v1299 = vadd.f32 %v1228, %v1252
          %v1300 = vadd.f32 %v1229, %v1252
          %v1301 = vadd.f32 %v1230, %v1252
          %v1302 = vadd.f32 %v1231, %v1252
          %v1303 = vadd.f32 %v1232, %v1252
          %v1304 = vadd.f32 %v1233, %v1252
          %v1305 = vadd.f32 %v1234, %v1252
          %v1306 = vadd.f32 %v1235, %v1252
          %v1307 = vadd.f32 %v1236, %v1252
          %v1308 = vadd.f32 %v1237, %v1252
          %v1309 = vadd.f32 %v1238, %v1252
          %v1310 = vadd.f32 %v1239, %v1252
          %v1311 = vadd.f32 %v1240, %v1252
          %v1312 = vadd.f32 %v1241, %v1252
          %v1313 = vadd.f32 %v1242, %v1252
          %v1314 = vadd.f32 %v1243, %v1252
          %v1315 = vadd.f32 %v1244, %v1252
          %v1316 = vadd.f32 %v1245, %v1252
          %v1317 = vadd.f32 %v1246, %v1252
          %v1318 = vmax.f32 %v1254, 0.0
          %v1319 = vmax.f32 %v1255, 0.0
          %v1320 = vmax.f32 %v1256, 0.0
          %v1321 = vmax.f32 %v1257, 0.0
          %v1322 = vmax.f32 %v1258, 0.0
          %v1323 = vmax.f32 %v1259, 0.0
          %v1324 = vmax.f32 %v1260, 0.0
          %v1325 = vmax.f32 %v1261, 0.0
          %v1326 = vmax.f32 %v1262, 0.0
          %v1327 = vmax.f32 %v1263, 0.0
          %v1328 = vmax.f32 %v1264, 0.0
          %v1329 = vmax.f32 %v1265, 0.0
          %v1330 = vmax.f32 %v1266, 0.0
          %v1331 = vmax.f32 %v1267, 0.0
          %v1332 = vmax.f32 %v1268, 0.0
          %v1333 = vmax.f32 %v1269, 0.0
          %v1334 = vmax.f32 %v1270, 0.0
          %v1335 = vmax.f32 %v1271, 0.0
          %v1336 = vmax.f32 %v1272, 0.0
          %v1337 = vmax.f32 %v1273, 0.0
          %v1338 = vmax.f32 %v1274, 0.0
          %v1339 = vmax.f32 %v1275, 0.0
          %v1340 = vmax.f32 %v1276, 0.0
          %v1341 = vmax.f32 %v1277, 0.0
          %v1342 = vmax.f32 %v1278, 0.0
          %v1343 = vmax.f32 %v1279, 0.0
          %v1344 = vmax.f32 %v1280, 0.0
          %v1345 = vmax.f32 %v1281, 0.0
          %v1346 = vmax.f32 %v1282, 0.0
          %v1347 = vmax.f32 %v1283, 0.0
          %v1348 = vmax.f32 %v1284, 0.0
          %v1349 = vmax.f32 %v1285, 0.0
          %v1350 = vmax.f32 %v1286, 0.0
          %v1351 = vmax.f32 %v1287, 0.0
          %v1352 = vmax.f32 %v1288, 0.0
          %v1353 = vmax.f32 %v1289, 0.0
          %v1354 = vmax.f32 %v1290, 0.0
          %v1355 = vmax.f32 %v1291, 0.0
          %v1356 = vmax.f32 %v1292, 0.0
          %v1357 = vmax.f32 %v1293, 0.0
          %v1358 = vmax.f32 %v1294, 0.0
          %v1359 = vmax.f32 %v1295, 0.0
          %v1360 = vmax.f32 %v1296, 0.0
          %v1361 = vmax.f32 %v1297, 0.0
          %v1362 = vmax.f32 %v1298, 0.0
          %v1363 = vmax.f32 %v1299, 0.0
          %v1364 = vmax.f32 %v1300, 0.0
          %v1365 = vmax.f32 %v1301, 0.0
          %v1366 = vmax.f32 %v1302, 0.0
          %v1367 = vmax.f32 %v1303, 0.0
          %v1368 = vmax.f32 %v1304, 0.0
          %v1369 = vmax.f32 %v1305, 0.0
          %v1370 = vmax.f32 %v1306, 0.0
          %v1371 = vmax.f32 %v1307, 0.0
          %v1372 = vmax.f32 %v1308, 0.0
          %v1373 = vmax.f32 %v1309, 0.0
          %v1374 = vmax.f32 %v1310, 0.0
          %v1375 = vmax.f32 %v1311, 0.0
          %v1376 = vmax.f32 %v1312, 0.0
          %v1377 = vmax.f32 %v1313, 0.0
          %v1378 = vmax.f32 %v1314, 0.0
          %v1379 = vmax.f32 %v1315, 0.0
          %v1380 = vmax.f32 %v1316, 0.0
          %v1381 = vmax.f32 %v1317, 0.0
          %1382 = vst [vmem:[%s271] sm:$0xff] %v1318
          %1383 = vst [vmem:[%s271 + $0x8] sm:$0xff] %v1319
          %1384 = vst [vmem:[%s271 + $0x10] sm:$0xff] %v1320
          %1385 = vst [vmem:[%s271 + $0x18] sm:$0xff] %v1321
          %1386 = vst [vmem:[%s271 + $0x20] sm:$0xff] %v1322
          %1387 = vst [vmem:[%s271 + $0x28] sm:$0xff] %v1323
          %1388 = vst [vmem:[%s271 + $0x30] sm:$0xff] %v1324
          %1389 = vst [vmem:[%s271 + $0x38] sm:$0xff] %v1325
          %1390 = vst [vmem:[%s271 + $0x40] sm:$0xff] %v1326
          %1391 = vst [vmem:[%s271 + $0x48] sm:$0xff] %v1327
          %1392 = vst [vmem:[%s271 + $0x50] sm:$0xff] %v1328
          %1393 = vst [vmem:[%s271 + $0x58] sm:$0xff] %v1329
          %1394 = vst [vmem:[%s271 + $0x60] sm:$0xff] %v1330
          %1395 = vst [vmem:[%s271 + $0x68] sm:$0xff] %v1331
          %1396 = vst [vmem:[%s271 + $0x70] sm:$0xff] %v1332
          %1397 = vst [vmem:[%s271 + $0x78] sm:$0xff] %v1333
          %1398 = vst [vmem:[%s271 + $0x80] sm:$0xff] %v1334
          %1399 = vst [vmem:[%s271 + $0x88] sm:$0xff] %v1335
          %1400 = vst [vmem:[%s271 + $0x90] sm:$0xff] %v1336
          %1401 = vst [vmem:[%s271 + $0x98] sm:$0xff] %v1337
          %1402 = vst [vmem:[%s271 + $0xa0] sm:$0xff] %v1338
          %1403 = vst [vmem:[%s271 + $0xa8] sm:$0xff] %v1339
          %1404 = vst [vmem:[%s271 + $0xb0] sm:$0xff] %v1340
          %1405 = vst [vmem:[%s271 + $0xb8] sm:$0xff] %v1341
          %1406 = vst [vmem:[%s271 + $0xc0] sm:$0xff] %v1342
          %1407 = vst [vmem:[%s271 + $0xc8] sm:$0xff] %v1343
          %1408 = vst [vmem:[%s271 + $0xd0] sm:$0xff] %v1344
          %1409 = vst [vmem:[%s271 + $0xd8] sm:$0xff] %v1345
          %1410 = vst [vmem:[%s271 + $0xe0] sm:$0xff] %v1346
          %1411 = vst [vmem:[%s271 + $0xe8] sm:$0xff] %v1347
          %1412 = vst [vmem:[%s271 + $0xf0] sm:$0xff] %v1348
          %1413 = vst [vmem:[%s271 + $0xf8] sm:$0xff] %v1349
          %1414 = vst [vmem:[%s271 + $0x100] sm:$0xff] %v1350
          %1415 = vst [vmem:[%s271 + $0x108] sm:$0xff] %v1351
          %1416 = vst [vmem:[%s271 + $0x110] sm:$0xff] %v1352
          %1417 = vst [vmem:[%s271 + $0x118] sm:$0xff] %v1353
          %1418 = vst [vmem:[%s271 + $0x120] sm:$0xff] %v1354
          %1419 = vst [vmem:[%s271 + $0x128] sm:$0xff] %v1355
          %1420 = vst [vmem:[%s271 + $0x130] sm:$0xff] %v1356
          %1421 = vst [vmem:[%s271 + $0x138] sm:$0xff] %v1357
          %1422 = vst [vmem:[%s271 + $0x140] sm:$0xff] %v1358
          %1423 = vst [vmem:[%s271 + $0x148] sm:$0xff] %v1359
          %1424 = vst [vmem:[%s271 + $0x150] sm:$0xff] %v1360
          %1425 = vst [vmem:[%s271 + $0x158] sm:$0xff] %v1361
          %1426 = vst [vmem:[%s271 + $0x160] sm:$0xff] %v1362
          %1427 = vst [vmem:[%s271 + $0x168] sm:$0xff] %v1363
          %1428 = vst [vmem:[%s271 + $0x170] sm:$0xff] %v1364
          %1429 = vst [vmem:[%s271 + $0x178] sm:$0xff] %v1365
          %1430 = vst [vmem:[%s271 + $0x180] sm:$0xff] %v1366
          %1431 = vst [vmem:[%s271 + $0x188] sm:$0xff] %v1367
          %1432 = vst [vmem:[%s271 + $0x190] sm:$0xff] %v1368
          %1433 = vst [vmem:[%s271 + $0x198] sm:$0xff] %v1369
          %1434 = vst [vmem:[%s271 + $0x1a0] sm:$0xff] %v1370
          %1435 = vst [vmem:[%s271 + $0x1a8] sm:$0xff] %v1371
          %1436 = vst [vmem:[%s271 + $0x1b0] sm:$0xff] %v1372
          %1437 = vst [vmem:[%s271 + $0x1b8] sm:$0xff] %v1373
          %1438 = vst [vmem:[%s271 + $0x1c0] sm:$0xff] %v1374
          %1439 = vst [vmem:[%s271 + $0x1c8] sm:$0xff] %v1375
          %1440 = vst [vmem:[%s271 + $0x1d0] sm:$0xff] %v1376
          %1441 = vst [vmem:[%s271 + $0x1d8] sm:$0xff] %v1377
          %1442 = vst [vmem:[%s271 + $0x1e0] sm:$0xff] %v1378
          %1443 = vst [vmem:[%s271 + $0x1e8] sm:$0xff] %v1379
          %1444 = vst [vmem:[%s271 + $0x1f0] sm:$0xff] %v1380
          %1445 = vst [vmem:[%s271 + $0x1f8] sm:$0xff] %v1381
        $region48: #{_conv2d_impl.1} parent=35 // pred_fallthru
          _
        %s1446 = sand.u32 %s155, 1
        %s1447 = scalar_lea.sflag [#allocation3], %s1446
        %s1448 = sand.u32 %s155, 1
        %s1449 = smul.addr %s1448, 512
        %s1450 = scalar_lea.vmem [#allocation2], %s1449
        // Predicated region
        $region49: #{_conv2d_impl.1} parent=35 // pred_check
          %p1451 = pneg %p165
        $region50: #{_conv2d_impl.1} parent=35 // pred_check_branch
          %1453 = sbr.rel (%p1451) target = $region52
        $region51: #{_conv2d_impl.1} parent=35 // pred_region
          %s1454 = smul.u32 64, %s23
          %s1456 = ssub.s32 8192, 8192
          %1457 = vsyncadd %s1447, %s1456
          %s1458 = sadd.s32 %s24, %s1454
          %s1459 = smul.addr %s1458, 128
          %s1460 = scalar_lea.hbm %s4, %s1459
          %s1461 = sshll.u32 %s1450, 4
          %s1462 = int_to_ptr.vmem [resolvable:$true] %s1461
          %1467 = dma.vmem_to_hbm [thread:$0]  %s1462, 8192, %s1460, %s1447, 128, 128, 8
        $region52: #{_conv2d_impl.1} parent=35 // pred_fallthru
          _
      $region36: #{_conv2d_impl.1} parent=5 // pred_fallthru
        _
      %p1468 = scmp.le.s32.totalorder 2, %s13
      // Predicated region
      $region53: #{_conv2d_impl.1} parent=5 // pred_check
        %p1469 = pneg %p1468
      $region54: #{_conv2d_impl.1} parent=5 // pred_check_branch
        %1471 = sbr.rel (%p1469) target = $region56
      $region55: #{_conv2d_impl.1} parent=5 // pred_region
        %s1472 = ssub.s32 %s13, 2
        // Predicated region
        $region57: #{_conv2d_impl.1} parent=55 // pred_check
          %p1473 = pneg %p171
        $region58: #{_conv2d_impl.1} parent=55 // pred_check_branch
          %1475 = sbr.rel (%p1473) target = $region60
        $region59: #{_conv2d_impl.1} parent=55 // pred_region
          %s1476 = sand.u32 %s156, 1
          %s1477 = scalar_lea.sflag [#allocation3], %s1476
          %s1478 = sand.u32 %s156, 1
          %s1479 = smul.addr %s1478, 512
          %s1480 = scalar_lea.vmem [#allocation2], %s1479
          %1481 = dma.done %s1477, 8192
        $region60: #{_conv2d_impl.1} parent=55 // pred_fallthru
          _
      $region56: #{_conv2d_impl.1} parent=5 // pred_fallthru
        _
    $region6: #{_conv2d_impl.1} parent=1 // loop_footer
      %s17 = sadd.s32 1, %s13
    $region7: #{_conv2d_impl.1} parent=1 // loop_footer_branch
      %12 = sbr.rel target = $region3
    $region8: #{_conv2d_impl.1} parent=1 // loop_exit
      _
    %1482 = vsyncpa [#allocation3], 1
    %s1483 = scalar_lea.sflag [#allocation3], 1
    %1484 = vsyncpa %s1483, 1

</llo_original>
